<compile_context>
chip_gen: v5e
topology: v5e:2x2
jax: 0.10.0
libtpu: 0.0.40
codegen_flags: <defaults>
</compile_context>

<pallas_src>
import jax
import jax.numpy as jnp
from jax.experimental import pallas as pl
from jax.experimental.pallas import tpu as pltpu

_LANE = 128          # feature dims padded to the TPU lane width
_EDGE_TILE = 256     # edges per reduction step (fills MXU M-dim on v6e/v7x)


def _round_up(x, m):
    return (x + m - 1) // m * m


def _pad2(a, rows, cols):
    return jnp.pad(a, ((0, rows - a.shape[0]), (0, cols - a.shape[1])))


def _vmem_limit_bytes():
    # Scoped-VMEM budget derived from the running chip: ~70% of physical
    # leaves headroom for double buffers and the hidden [TE, N] one-hot
    # temporaries (v7x: ~45 MiB of 64; v5e/v6e: ~90 MiB of 128).
    try:
        cap = int(pltpu.get_tpu_info().vmem_capacity_bytes)
        return min(int(cap * 0.7), 100 * 1024 * 1024)
    except Exception:
        return 40 * 1024 * 1024    # safe on every generation


# ----------------------------------------------------------------------------
# Fused kernel: f_message MLP + scatter_add (edge-tiled reduction) with the
# f_node MLP applied to the VMEM-resident m_sum in the last grid step.
# ----------------------------------------------------------------------------
def _make_fused_message_node_kernel(acts_dtype):
    def kernel(x_ref, row_s_ref, col_s_ref, row_l_ref,
               w1a_ref, w1b_ref, b1_ref, w2_ref, b2_ref,
               u_ref, nw1x_ref, nw1m_ref, nw1u_ref, nb1_ref, nw2_ref, nb2_ref,
               out_ref, msum_ref):
        step = pl.program_id(0)

        @pl.when(step == 0)
        def _init():
            msum_ref[...] = jnp.zeros_like(msum_ref)

        n_p = msum_ref.shape[0]
        te = row_s_ref.shape[0]

        row_s = row_s_ref[...]                  # [TE, 1] int32 (sublane layout)
        col_s = col_s_ref[...]                  # [TE, 1] int32
        row_l = row_l_ref[...]                  # [1, TE] int32 (lane layout)

        # Gather raw node rows for this edge tile via one-hot matmuls on the
        # MXU; both one-hot orientations come straight from iotas, so no XLU
        # transpose is needed.  Operands are cast to `acts_dtype` (bf16 on
        # v6e/v7x doubles MXU rate; 0/1 one-hots are exact in bf16).
        x_c = x_ref[...].astype(acts_dtype)
        node_g = jax.lax.broadcasted_iota(jnp.int32, (te, n_p), 1)
        g_row = (node_g == row_s).astype(jnp.float32).astype(acts_dtype)
        g_col = (node_g == col_s).astype(jnp.float32).astype(acts_dtype)
        gx_r = jnp.dot(g_row, x_c, preferred_element_type=jnp.float32)
        gx_c = jnp.dot(g_col, x_c, preferred_element_type=jnp.float32)

        # f_message MLP with fm_w1 split into row blocks so the [TE, 2D]
        # concat of (x[row], x[col]) never materializes.  f32 accumulation.
        h = (jnp.dot(gx_r.astype(acts_dtype), w1a_ref[...],
                     preferred_element_type=jnp.float32)
             + jnp.dot(gx_c.astype(acts_dtype), w1b_ref[...],
                       preferred_element_type=jnp.float32)
             + b1_ref[...])
        h = jnp.maximum(h, 0.0)
        m = jnp.dot(h.astype(acts_dtype), w2_ref[...],
                    preferred_element_type=jnp.float32) + b2_ref[...]
        m = jnp.maximum(m, 0.0)                                     # [TE, 2D]

        # scatter_add(m, row): one-hot [N, TE] @ m; padded edges (row == n_p)
        # match no node row and contribute nothing.
        node_s = jax.lax.broadcasted_iota(jnp.int32, (n_p, te), 0)
        s_row = (node_s == row_l).astype(jnp.float32).astype(acts_dtype)
        msum_ref[...] += jnp.dot(s_row, m.astype(acts_dtype),
                                 preferred_element_type=jnp.float32)

        # f_node MLP epilogue on the VMEM-resident m_sum (last step only);
        # fn_w1 is split into x / m_sum / u_sum row blocks so the [N, 4D]
        # concat never exists.  Kept f32 for output accuracy (runs once).
        @pl.when(step == pl.num_programs(0) - 1)
        def _finalize():
            h2 = (jnp.dot(x_ref[...], nw1x_ref[...],
                          preferred_element_type=jnp.float32)
                  + jnp.dot(msum_ref[...], nw1m_ref[...],
                            preferred_element_type=jnp.float32)
                  + jnp.dot(u_ref[...], nw1u_ref[...],
                            preferred_element_type=jnp.float32)
                  + nb1_ref[...])
            h2 = jnp.maximum(h2, 0.0)
            o = jnp.dot(h2, nw2_ref[...],
                        preferred_element_type=jnp.float32) + nb2_ref[...]
            out_ref[...] = jnp.maximum(o, 0.0)

    return kernel


def fused_message_node(x_p, row_s, col_s, row_l, u_sum_p, pp, acts_dtype):
    n_p, d_p = x_p.shape
    d2_p = pp["fm_w1a"].shape[1]
    h_p = pp["fn_w1x"].shape[1]
    o_p = pp["fn_w2"].shape[1]
    e_p = row_l.shape[1]
    te = _EDGE_TILE

    def const(shape):
        return pl.BlockSpec(shape, lambda e: (0, 0))

    return pl.pallas_call(
        _make_fused_message_node_kernel(acts_dtype),
        out_shape=jax.ShapeDtypeStruct((n_p, o_p), jnp.float32),
        grid_spec=pltpu.PrefetchScalarGridSpec(
            num_scalar_prefetch=0,
            grid=(e_p // te,),
            in_specs=[
                const((n_p, d_p)),                          # x (VMEM resident)
                pl.BlockSpec((te, 1), lambda e: (e, 0)),    # row (sublane)
                pl.BlockSpec((te, 1), lambda e: (e, 0)),    # col (sublane)
                pl.BlockSpec((1, te), lambda e: (0, e)),    # row (lane)
                const((d_p, d2_p)), const((d_p, d2_p)),     # fm W1a, W1b
                const((1, d2_p)),                           # fm b1
                const((d2_p, d2_p)), const((1, d2_p)),      # fm W2, b2
                const((n_p, d_p)),                          # u_sum
                const((d_p, h_p)), const((d2_p, h_p)), const((d_p, h_p)),
                const((1, h_p)), const((h_p, o_p)), const((1, o_p)),
            ],
            out_specs=const((n_p, o_p)),
            scratch_shapes=[pltpu.VMEM((n_p, d2_p), jnp.float32)],
        ),
        compiler_params=pltpu.CompilerParams(
            dimension_semantics=("arbitrary",),     # edge-tile reduction axis
            vmem_limit_bytes=_vmem_limit_bytes()),
    )(x_p, row_s, col_s, row_l,
      pp["fm_w1a"], pp["fm_w1b"], pp["fm_b1"], pp["fm_w2"], pp["fm_b2"],
      u_sum_p, pp["fn_w1x"], pp["fn_w1m"], pp["fn_w1u"], pp["fn_b1"],
      pp["fn_w2"], pp["fn_b2"])


# ----------------------------------------------------------------------------
# f_match: all (g1, g2) pairs batched on a "parallel" grid axis.
# ----------------------------------------------------------------------------
def _f_match_kernel(lens_ref, g1_ref, g2_ref, u1_ref, u2_ref):
    p = pl.program_id(0)
    n1 = lens_ref[2 * p]
    n2 = lens_ref[2 * p + 1]
    g1 = g1_ref[0]                               # [MAXN, D_pad]
    g2 = g2_ref[0]
    maxn = g1.shape[0]

    # L2 normalize with rsqrt (EUP slot) instead of sqrt + divide (VALU).
    inv1 = jax.lax.rsqrt(jnp.maximum(
        jnp.sum(g1 * g1, axis=1, keepdims=True), 1e-24))
    inv2 = jax.lax.rsqrt(jnp.maximum(
        jnp.sum(g2 * g2, axis=1, keepdims=True), 1e-24))
    g1n = g1 * inv1
    g2n = g2 * inv2

    # Two MXU matmuls (QK^T pattern) instead of softmax(sim.T): no transpose.
    dn = (((1,), (1,)), ((), ()))
    sim12 = jax.lax.dot_general(g1n, g2n, dn,
                                preferred_element_type=jnp.float32)   # [n1,n2]
    sim21 = jax.lax.dot_general(g2n, g1n, dn,
                                preferred_element_type=jnp.float32)   # [n2,n1]

    # Mask padded key columns before the row-wise (lane-axis) softmax.
    col_ids = jax.lax.broadcasted_iota(jnp.int32, (maxn, maxn), 1)
    neg = jnp.float32(-1e30)
    sim12 = jnp.where(col_ids < n2, sim12, neg)
    sim21 = jnp.where(col_ids < n1, sim21, neg)

    def _softmax_rows(s):
        mx = jnp.max(s, axis=1, keepdims=True)
        e = jnp.exp(s - mx)
        # Exact divide (review correctness item): matrices are tiny, the
        # approximate EUP reciprocal only cost accuracy.
        return e / jnp.sum(e, axis=1, keepdims=True)

    a12 = _softmax_rows(sim12)
    a21 = _softmax_rows(sim21)
    u1_ref[0] = g1 - jnp.dot(a12, g2, preferred_element_type=jnp.float32)
    u2_ref[0] = g2 - jnp.dot(a21, g1, preferred_element_type=jnp.float32)


def f_match_all_pairs(g1s, g2s, lens_flat):
    p_num, maxn, d_p = g1s.shape
    pair_spec = pl.BlockSpec((1, maxn, d_p), lambda p, lens: (p, 0, 0))
    return pl.pallas_call(
        _f_match_kernel,
        out_shape=(jax.ShapeDtypeStruct((p_num, maxn, d_p), jnp.float32),
                   jax.ShapeDtypeStruct((p_num, maxn, d_p), jnp.float32)),
        grid_spec=pltpu.PrefetchScalarGridSpec(
            num_scalar_prefetch=1,          # flat (n1, n2, n1, n2, ...) in SMEM
            grid=(p_num,),
            in_specs=[pair_spec, pair_spec],
            out_specs=(pair_spec, pair_spec),
        ),
        compiler_params=pltpu.CompilerParams(
            dimension_semantics=("parallel",),   # pairs shard across TCs (v7x)
            vmem_limit_bytes=_vmem_limit_bytes()),
    )(lens_flat, g1s, g2s)


# ----------------------------------------------------------------------------
# Parameter padding / splitting (zero padding is exact through Linear+ReLU).
# ----------------------------------------------------------------------------
def _prepare_padded_params(params, input_dim, acts_dtype):
    d = input_dim
    d2, h = 2 * d, 4 * d
    o = params["fn_w2"].shape[1]
    d_p, d2_p = _round_up(d, _LANE), _round_up(d2, _LANE)
    h_p, o_p = _round_up(h, _LANE), _round_up(o, _LANE)

    fm_w1, fn_w1 = params["fm_w1"], params["fn_w1"]
    return {
        # f_message layer 1 split into x[row] / x[col] row blocks; message-path
        # weights stored in the MXU operand dtype (bf16 halves DMA + VMEM).
        "fm_w1a": _pad2(fm_w1[:d], d_p, d2_p).astype(acts_dtype),
        "fm_w1b": _pad2(fm_w1[d:], d_p, d2_p).astype(acts_dtype),
        "fm_b1": _pad2(params["fm_b1"].reshape(1, -1), 1, d2_p),
        "fm_w2": _pad2(params["fm_w2"], d2_p, d2_p).astype(acts_dtype),
        "fm_b2": _pad2(params["fm_b2"].reshape(1, -1), 1, d2_p),
        # f_node layer 1 split into x / m_sum / u_sum row blocks (kept f32).
        "fn_w1x": _pad2(fn_w1[:d], d_p, h_p),
        "fn_w1m": _pad2(fn_w1[d:3 * d], d2_p, h_p),
        "fn_w1u": _pad2(fn_w1[3 * d:], d_p, h_p),
        "fn_b1": _pad2(params["fn_b1"].reshape(1, -1), 1, h_p),
        "fn_w2": _pad2(params["fn_w2"], h_p, o_p),
        "fn_b2": _pad2(params["fn_b2"].reshape(1, -1), 1, o_p),
    }


# ----------------------------------------------------------------------------
# Full GMNPropagator forward.
# ----------------------------------------------------------------------------
def gmn_propagator_forward(x, row, col, ind_list, params, use_bf16_mxu=True):
    n, d = x.shape
    out_dim = params["fn_w2"].shape[1]
    d_p = _round_up(d, _LANE)
    n_p = _round_up(n, 8)
    acts_dtype = jnp.bfloat16 if use_bf16_mxu else jnp.float32

    x_p = _pad2(x.astype(jnp.float32), n_p, d_p)
    pp = _prepare_padded_params(params, d, acts_dtype)

    # ---- f_match first: its u_sum feeds the fused kernel's f_node epilogue.
    pairs = [(ind_list[i], ind_list[i + 1]) for i in range(0, len(ind_list), 2)]
    maxn = _round_up(
        max(max(e1 - s1, e2 - s2) for (s1, e1), (s2, e2) in pairs), 8)
    g1_blk, g2_blk, lens = [], [], []
    for (s1, e1), (s2, e2) in pairs:
        g1_blk.append(jnp.pad(x_p[s1:e1], ((0, maxn - (e1 - s1)), (0, 0))))
        g2_blk.append(jnp.pad(x_p[s2:e2], ((0, maxn - (e2 - s2)), (0, 0))))
        lens += [e1 - s1, e2 - s2]
    u1s, u2s = f_match_all_pairs(jnp.stack(g1_blk), jnp.stack(g2_blk),
                                 jnp.array(lens, dtype=jnp.int32))
    u_parts = []
    for k, ((s1, e1), (s2, e2)) in enumerate(pairs):
        u_parts.append(u1s[k, :e1 - s1])
        u_parts.append(u2s[k, :e2 - s2])
    u_sum_p = _pad2(jnp.concatenate(u_parts, axis=0), n_p, d_p)

    # ---- fused f_message MLP + scatter_add + f_node MLP ----
    e = row.shape[0]
    e_p = _round_up(max(e, 1), _EDGE_TILE)
    sentinel = n_p                                 # maps to an all-zero one-hot
    row_pad = jnp.full((e_p,), sentinel, jnp.int32).at[:e].set(
        row.astype(jnp.int32))
    col_pad = jnp.full((e_p,), sentinel, jnp.int32).at[:e].set(
        col.astype(jnp.int32))
    out_p = fused_message_node(
        x_p, row_pad.reshape(e_p, 1), col_pad.reshape(e_p, 1),
        row_pad.reshape(1, e_p), u_sum_p, pp, acts_dtype)
    return out_p[:n, :out_dim]


# ----------------------------------------------------------------------------
# Pure-JAX reference (same math) for a correctness check.
# ----------------------------------------------------------------------------
def reference_forward(x, row, col, ind_list, p):
    m_in = jnp.concatenate([x[row], x[col]], axis=1)
    h = jax.nn.relu(m_in @ p["fm_w1"] + p["fm_b1"])
    m = jax.nn.relu(h @ p["fm_w2"] + p["fm_b2"])
    m_sum = jax.ops.segment_sum(m, row, num_segments=x.shape[0])

    def helper(a, b):
        an = a / jnp.maximum(jnp.linalg.norm(a, axis=1, keepdims=True), 1e-12)
        bn = b / jnp.maximum(jnp.linalg.norm(b, axis=1, keepdims=True), 1e-12)
        att = jax.nn.softmax(an @ bn.T, axis=1)
        return a - att @ b

    u_parts = []
    for i in range(0, len(ind_list), 2):
        (s1, e1), (s2, e2) = ind_list[i], ind_list[i + 1]
        g1, g2 = x[s1:e1], x[s2:e2]
        u_parts += [helper(g1, g2), helper(g2, g1)]
    u_sum = jnp.concatenate(u_parts, axis=0)

    in_f = jnp.concatenate([x, m_sum, u_sum], axis=1)
    h2 = jax.nn.relu(in_f @ p["fn_w1"] + p["fn_b1"])
    return jax.nn.relu(h2 @ p["fn_w2"] + p["fn_b2"])


# ----------------------------------------------------------------------------
# Deterministic parameter init (xavier_normal with relu gain, like the module).
# ----------------------------------------------------------------------------
def _xavier_normal(key, fan_in, fan_out, gain):
    std = gain * jnp.sqrt(2.0 / (fan_in + fan_out))
    return (std * jax.random.normal(key, (fan_in, fan_out))).astype(jnp.float32)


def _bias(key, fan_in, size):
    bound = 1.0 / jnp.sqrt(float(fan_in))
    return jax.random.uniform(key, (size,), jnp.float32, -bound, bound)


def make_params(key, input_dim, output_dim):
    gain = jnp.sqrt(2.0)  # nn.init.calculate_gain('relu')
    d2, d4 = 2 * input_dim, 4 * input_dim
    ks = jax.random.split(key, 8)
    return {
        # f_message: MLP(2D -> 2D -> 2D), ReLU after each layer
        "fm_w1": _xavier_normal(ks[0], d2, d2, gain),
        "fm_b1": _bias(ks[1], d2, d2),
        "fm_w2": _xavier_normal(ks[2], d2, d2, gain),
        "fm_b2": _bias(ks[3], d2, d2),
        # f_node: MLP(4D -> 4D -> out_dim), ReLU after each layer
        "fn_w1": _xavier_normal(ks[4], d4, d4, gain),
        "fn_b1": _bias(ks[5], d4, d4),
        "fn_w2": _xavier_normal(ks[6], d4, output_dim, gain),
        "fn_b2": _bias(ks[7], d4, output_dim),
    }


if __name__ == "__main__":
    input_dim = 32
    output_dim = 32
    n1g, n2g = 8, 8               # two graphs forming one (g1, g2) pair
    n_nodes = n1g + n2g
    n_edges = 32

    key = jax.random.PRNGKey(0)
    k_x, k_row, k_col, k_par = jax.random.split(key, 4)

    x = jax.random.normal(k_x, (n_nodes, input_dim), jnp.float32)
    row = jax.random.randint(k_row, (n_edges,), 0, n_nodes, jnp.int32)
    col = jax.random.randint(k_col, (n_edges,), 0, n_nodes, jnp.int32)
    ind_list = [(0, n1g), (n1g, n_nodes)]   # batch_data.merge_data['ind_list']

    params = make_params(k_par, input_dim, output_dim)
    ref = reference_forward(x, row, col, ind_list, params)

    # f32 MXU operand path: parity with the f32 PyTorch module.
    fwd_f32 = jax.jit(lambda x_, r_, c_, p_: gmn_propagator_forward(
        x_, r_, c_, ind_list, p_, use_bf16_mxu=False))
    out_f32 = jax.block_until_ready(fwd_f32(x, row, col, params))
    assert out_f32.shape == (n_nodes, output_dim)
    assert bool(jnp.all(jnp.isfinite(out_f32)))
    assert jnp.allclose(out_f32, ref, rtol=1e-2, atol=1e-2), float(
        jnp.max(jnp.abs(out_f32 - ref)))

    # bf16 MXU operand path (the fast path on v6e/v7x).  Semantic parity is
    # established by the f32 run above; this only guards against gross errors
    # from the bf16 operand casts (~0.2% relative per matmul stage).
    fwd_bf16 = jax.jit(lambda x_, r_, c_, p_: gmn_propagator_forward(
        x_, r_, c_, ind_list, p_, use_bf16_mxu=True))
    out_bf16 = jax.block_until_ready(fwd_bf16(x, row, col, params))
    assert out_bf16.shape == (n_nodes, output_dim)
    assert bool(jnp.all(jnp.isfinite(out_bf16)))
    assert jnp.allclose(out_bf16, ref, rtol=1e-1, atol=1e-1), float(
        jnp.max(jnp.abs(out_bf16 - ref)))

    print("KERNEL_OK")
</pallas_src>

<mosaic_0001>
module attributes {stable_mosaic.version = 11 : i64} {
  func.func @_f_match_kernel(%arg0: i32, %arg1: memref<2xi32, #tpu.memory_space<smem>>, %arg2: memref<1x8x128xf32, #tpu.memory_space<vmem>>, %arg3: memref<1x8x128xf32, #tpu.memory_space<vmem>>, %arg4: memref<1x8x128xf32, #tpu.memory_space<vmem>>, %arg5: memref<1x8x128xf32, #tpu.memory_space<vmem>>) attributes {dimension_semantics = [#tpu.dimension_semantics<parallel>], iteration_bounds = array<i64: 1>, scalar_prefetch = 1 : i64, scratch_operands = 0 : i64, tpu.core_type = #tpu.core_type<tc>, window_params = [{transform_indices = @transform_0, window_bounds = array<i64: 1, 8, 128>}, {transform_indices = @transform_1, window_bounds = array<i64: 1, 8, 128>}, {transform_indices = @transform_2, window_bounds = array<i64: 1, 8, 128>}, {transform_indices = @transform_3, window_bounds = array<i64: 1, 8, 128>}]} {
    %c2_i32 = arith.constant 2 : i32
    %0 = arith.muli %c2_i32, %arg0 : i32
    %1 = arith.index_cast %0 : i32 to index
    %2 = memref.load %arg1[%1] : memref<2xi32, #tpu.memory_space<smem>>
    %c2_i32_0 = arith.constant 2 : i32
    %3 = arith.muli %c2_i32_0, %arg0 : i32
    %c1_i32 = arith.constant 1 : i32
    %4 = arith.addi %3, %c1_i32 : i32
    %5 = arith.index_cast %4 : i32 to index
    %6 = memref.load %arg1[%5] : memref<2xi32, #tpu.memory_space<smem>>
    %c0 = arith.constant 0 : index
    %c0_1 = arith.constant 0 : index
    %c0_2 = arith.constant 0 : index
    %7 = vector.load %arg2[%c0, %c0_1, %c0_2] : memref<1x8x128xf32, #tpu.memory_space<vmem>>, vector<1x8x128xf32>
    %8 = vector.shape_cast %7 : vector<1x8x128xf32> to vector<8x128xf32>
    %c0_3 = arith.constant 0 : index
    %c0_4 = arith.constant 0 : index
    %c0_5 = arith.constant 0 : index
    %9 = vector.load %arg3[%c0_3, %c0_4, %c0_5] : memref<1x8x128xf32, #tpu.memory_space<vmem>>, vector<1x8x128xf32>
    %10 = vector.shape_cast %9 : vector<1x8x128xf32> to vector<8x128xf32>
    %11 = arith.mulf %8, %8 : vector<8x128xf32>
    %cst = arith.constant dense<0.000000e+00> : vector<8xf32>
    %12 = vector.multi_reduction <add>, %11, %cst [1] : vector<8x128xf32> to vector<8xf32>
    %13 = vector.shape_cast %12 : vector<8xf32> to vector<8x1xf32>
    %cst_6 = arith.constant 1.000000e-24 : f32
    %14 = vector.broadcast %cst_6 : f32 to vector<8x1xf32>
    %15 = arith.maximumf %13, %14 : vector<8x1xf32>
    %16 = math.rsqrt %15 : vector<8x1xf32>
    %17 = arith.mulf %10, %10 : vector<8x128xf32>
    %cst_7 = arith.constant dense<0.000000e+00> : vector<8xf32>
    %18 = vector.multi_reduction <add>, %17, %cst_7 [1] : vector<8x128xf32> to vector<8xf32>
    %19 = vector.shape_cast %18 : vector<8xf32> to vector<8x1xf32>
    %cst_8 = arith.constant 1.000000e-24 : f32
    %20 = vector.broadcast %cst_8 : f32 to vector<8x1xf32>
    %21 = arith.maximumf %19, %20 : vector<8x1xf32>
    %22 = math.rsqrt %21 : vector<8x1xf32>
    %23 = vector.broadcast %16 : vector<8x1xf32> to vector<8x128xf32>
    %24 = arith.mulf %8, %23 : vector<8x128xf32>
    %25 = vector.broadcast %22 : vector<8x1xf32> to vector<8x128xf32>
    %26 = arith.mulf %10, %25 : vector<8x128xf32>
    %cst_9 = arith.constant dense<0.000000e+00> : vector<8x8xf32>
    %27 = tpu.matmul %24, %26, %cst_9 {dimension_numbers = #tpu.dot_dimension_numbers<[1], [1], [0], [0], [0, 0, 1, 0], [], []>} : vector<8x128xf32>, vector<8x128xf32>, vector<8x8xf32> -> vector<8x8xf32>
    %cst_10 = arith.constant dense<0.000000e+00> : vector<8x8xf32>
    %28 = tpu.matmul %26, %24, %cst_10 {dimension_numbers = #tpu.dot_dimension_numbers<[1], [1], [0], [0], [0, 0, 1, 0], [], []>} : vector<8x128xf32>, vector<8x128xf32>, vector<8x8xf32> -> vector<8x8xf32>
    %29 = tpu.iota {dimensions = array<i32: 1>} : vector<8x8xi32>
    %30 = vector.broadcast %6 : i32 to vector<8x8xi32>
    %31 = arith.cmpi slt, %29, %30 : vector<8x8xi32>
    %cst_11 = arith.constant -1.000000e+30 : f32
    %32 = vector.broadcast %cst_11 : f32 to vector<8x8xf32>
    %33 = arith.select %31, %27, %32 : vector<8x8xi1>, vector<8x8xf32>
    %34 = vector.broadcast %2 : i32 to vector<8x8xi32>
    %35 = arith.cmpi slt, %29, %34 : vector<8x8xi32>
    %cst_12 = arith.constant -1.000000e+30 : f32
    %36 = vector.broadcast %cst_12 : f32 to vector<8x8xf32>
    %37 = arith.select %35, %28, %36 : vector<8x8xi1>, vector<8x8xf32>
    %cst_13 = arith.constant dense<0xFF800000> : vector<8xf32>
    %38 = vector.multi_reduction <maximumf>, %33, %cst_13 [1] : vector<8x8xf32> to vector<8xf32>
    %39 = vector.shape_cast %38 : vector<8xf32> to vector<8x1xf32>
    %40 = vector.broadcast %39 : vector<8x1xf32> to vector<8x8xf32>
    %41 = arith.subf %33, %40 : vector<8x8xf32>
    %42 = math.exp %41 : vector<8x8xf32>
    %cst_14 = arith.constant dense<0.000000e+00> : vector<8xf32>
    %43 = vector.multi_reduction <add>, %42, %cst_14 [1] : vector<8x8xf32> to vector<8xf32>
    %44 = vector.shape_cast %43 : vector<8xf32> to vector<8x1xf32>
    %45 = vector.broadcast %44 : vector<8x1xf32> to vector<8x8xf32>
    %46 = arith.divf %42, %45 : vector<8x8xf32>
    %cst_15 = arith.constant dense<0xFF800000> : vector<8xf32>
    %47 = vector.multi_reduction <maximumf>, %37, %cst_15 [1] : vector<8x8xf32> to vector<8xf32>
    %48 = vector.shape_cast %47 : vector<8xf32> to vector<8x1xf32>
    %49 = vector.broadcast %48 : vector<8x1xf32> to vector<8x8xf32>
    %50 = arith.subf %37, %49 : vector<8x8xf32>
    %51 = math.exp %50 : vector<8x8xf32>
    %cst_16 = arith.constant dense<0.000000e+00> : vector<8xf32>
    %52 = vector.multi_reduction <add>, %51, %cst_16 [1] : vector<8x8xf32> to vector<8xf32>
    %53 = vector.shape_cast %52 : vector<8xf32> to vector<8x1xf32>
    %54 = vector.broadcast %53 : vector<8x1xf32> to vector<8x8xf32>
    %55 = arith.divf %51, %54 : vector<8x8xf32>
    %cst_17 = arith.constant dense<0.000000e+00> : vector<8x128xf32>
    %56 = tpu.matmul %46, %10, %cst_17 {dimension_numbers = #tpu.dot_dimension_numbers<[1], [0], [0], [1], [0, 0, 1, 1], [], []>} : vector<8x8xf32>, vector<8x128xf32>, vector<8x128xf32> -> vector<8x128xf32>
    %57 = arith.subf %8, %56 : vector<8x128xf32>
    %c0_18 = arith.constant 0 : index
    %c0_19 = arith.constant 0 : index
    %c0_20 = arith.constant 0 : index
    %58 = vector.load %arg4[%c0_18, %c0_19, %c0_20] : memref<1x8x128xf32, #tpu.memory_space<vmem>>, vector<1x8x128xf32>
    %59 = vector.shape_cast %58 : vector<1x8x128xf32> to vector<8x128xf32>
    %60 = vector.shape_cast %57 : vector<8x128xf32> to vector<1x8x128xf32>
    tpu.vector_store %arg4[%c0_18, %c0_19, %c0_20], %60 {strides = array<i32>} : memref<1x8x128xf32, #tpu.memory_space<vmem>>, vector<1x8x128xf32>,
    %cst_21 = arith.constant dense<0.000000e+00> : vector<8x128xf32>
    %61 = tpu.matmul %55, %8, %cst_21 {dimension_numbers = #tpu.dot_dimension_numbers<[1], [0], [0], [1], [0, 0, 1, 1], [], []>} : vector<8x8xf32>, vector<8x128xf32>, vector<8x128xf32> -> vector<8x128xf32>
    %62 = arith.subf %10, %61 : vector<8x128xf32>
    %c0_22 = arith.constant 0 : index
    %c0_23 = arith.constant 0 : index
    %c0_24 = arith.constant 0 : index
    %63 = vector.load %arg5[%c0_22, %c0_23, %c0_24] : memref<1x8x128xf32, #tpu.memory_space<vmem>>, vector<1x8x128xf32>
    %64 = vector.shape_cast %63 : vector<1x8x128xf32> to vector<8x128xf32>
    %65 = vector.shape_cast %62 : vector<8x128xf32> to vector<1x8x128xf32>
    tpu.vector_store %arg5[%c0_22, %c0_23, %c0_24], %65 {strides = array<i32>} : memref<1x8x128xf32, #tpu.memory_space<vmem>>, vector<1x8x128xf32>,
    return
  }
  func.func @transform_0(%arg0: i32, %arg1: memref<2xi32, #tpu.memory_space<smem>>) -> (i32, i32, i32) {
    %c0_i32 = arith.constant 0 : i32
    %c0_i32_0 = arith.constant 0 : i32
    %c0_i32_1 = arith.constant 0 : i32
    return %arg0, %c0_i32, %c0_i32_0 : i32, i32, i32
  }
  func.func @transform_1(%arg0: i32, %arg1: memref<2xi32, #tpu.memory_space<smem>>) -> (i32, i32, i32) {
    %c0_i32 = arith.constant 0 : i32
    %c0_i32_0 = arith.constant 0 : i32
    %c0_i32_1 = arith.constant 0 : i32
    return %arg0, %c0_i32, %c0_i32_0 : i32, i32, i32
  }
  func.func @transform_2(%arg0: i32, %arg1: memref<2xi32, #tpu.memory_space<smem>>) -> (i32, i32, i32) {
    %c0_i32 = arith.constant 0 : i32
    %c0_i32_0 = arith.constant 0 : i32
    %c0_i32_1 = arith.constant 0 : i32
    return %arg0, %c0_i32, %c0_i32_0 : i32, i32, i32
  }
  func.func @transform_3(%arg0: i32, %arg1: memref<2xi32, #tpu.memory_space<smem>>) -> (i32, i32, i32) {
    %c0_i32 = arith.constant 0 : i32
    %c0_i32_0 = arith.constant 0 : i32
    %c0_i32_1 = arith.constant 0 : i32
    return %arg0, %c0_i32, %c0_i32_0 : i32, i32, i32
  }
}

module attributes {stable_mosaic.version = 11 : i64} {
  func.func @kernel(%arg0: i32, %arg1: memref<16x128xf32, #tpu.memory_space<vmem>>, %arg2: memref<256x1xi32, #tpu.memory_space<vmem>>, %arg3: memref<256x1xi32, #tpu.memory_space<vmem>>, %arg4: memref<1x256xi32, #tpu.memory_space<vmem>>, %arg5: memref<128x128xf32, #tpu.memory_space<vmem>>, %arg6: memref<128x128xf32, #tpu.memory_space<vmem>>, %arg7: memref<1x128xf32, #tpu.memory_space<vmem>>, %arg8: memref<128x128xf32, #tpu.memory_space<vmem>>, %arg9: memref<1x128xf32, #tpu.memory_space<vmem>>, %arg10: memref<16x128xf32, #tpu.memory_space<vmem>>, %arg11: memref<128x128xf32, #tpu.memory_space<vmem>>, %arg12: memref<128x128xf32, #tpu.memory_space<vmem>>, %arg13: memref<128x128xf32, #tpu.memory_space<vmem>>, %arg14: memref<1x128xf32, #tpu.memory_space<vmem>>, %arg15: memref<128x128xf32, #tpu.memory_space<vmem>>, %arg16: memref<1x128xf32, #tpu.memory_space<vmem>>, %arg17: memref<16x128xf32, #tpu.memory_space<vmem>>, %arg18: memref<16x128xf32, #tpu.memory_space<vmem>>) attributes {dimension_semantics = [#tpu.dimension_semantics<arbitrary>], iteration_bounds = array<i64: 1>, scalar_prefetch = 0 : i64, scratch_operands = 1 : i64, tpu.core_type = #tpu.core_type<tc>, window_params = [{pipeline_mode = #tpu.pipeline_mode<synchronous>, transform_indices = @transform_0, window_bounds = array<i64: 16, 128>}, {transform_indices = @transform_1, window_bounds = array<i64: 256, 1>}, {transform_indices = @transform_2, window_bounds = array<i64: 256, 1>}, {transform_indices = @transform_3, window_bounds = array<i64: 1, 256>}, {pipeline_mode = #tpu.pipeline_mode<synchronous>, transform_indices = @transform_4, window_bounds = array<i64: 128, 128>}, {pipeline_mode = #tpu.pipeline_mode<synchronous>, transform_indices = @transform_5, window_bounds = array<i64: 128, 128>}, {pipeline_mode = #tpu.pipeline_mode<synchronous>, transform_indices = @transform_6, window_bounds = array<i64: 1, 128>}, {pipeline_mode = #tpu.pipeline_mode<synchronous>, transform_indices = @transform_7, window_bounds = array<i64: 128, 128>}, {pipeline_mode = #tpu.pipeline_mode<synchronous>, transform_indices = @transform_8, window_bounds = array<i64: 1, 128>}, {pipeline_mode = #tpu.pipeline_mode<synchronous>, transform_indices = @transform_9, window_bounds = array<i64: 16, 128>}, {pipeline_mode = #tpu.pipeline_mode<synchronous>, transform_indices = @transform_10, window_bounds = array<i64: 128, 128>}, {pipeline_mode = #tpu.pipeline_mode<synchronous>, transform_indices = @transform_11, window_bounds = array<i64: 128, 128>}, {pipeline_mode = #tpu.pipeline_mode<synchronous>, transform_indices = @transform_12, window_bounds = array<i64: 128, 128>}, {pipeline_mode = #tpu.pipeline_mode<synchronous>, transform_indices = @transform_13, window_bounds = array<i64: 1, 128>}, {pipeline_mode = #tpu.pipeline_mode<synchronous>, transform_indices = @transform_14, window_bounds = array<i64: 128, 128>}, {pipeline_mode = #tpu.pipeline_mode<synchronous>, transform_indices = @transform_15, window_bounds = array<i64: 1, 128>}, {pipeline_mode = #tpu.pipeline_mode<synchronous>, transform_indices = @transform_16, window_bounds = array<i64: 16, 128>}]} {
    %c0_i32 = arith.constant 0 : i32
    %0 = arith.cmpi eq, %arg0, %c0_i32 : i32
    %1 = arith.extui %0 : i1 to i32
    %c0_i32_0 = arith.constant 0 : i32
    %2 = arith.cmpi ne, %1, %c0_i32_0 : i32
    scf.if %2 {
      %cst_31 = arith.constant 0.000000e+00 : f32
      %47 = vector.broadcast %cst_31 : f32 to vector<16x128xf32>
      %c0_32 = arith.constant 0 : index
      %c0_33 = arith.constant 0 : index
      %48 = vector.load %arg18[%c0_32, %c0_33] : memref<16x128xf32, #tpu.memory_space<vmem>>, vector<16x128xf32>
      tpu.vector_store %arg18[%c0_32, %c0_33], %47 {strides = array<i32>} : memref<16x128xf32, #tpu.memory_space<vmem>>, vector<16x128xf32>,
    } else {
    }
    %c0 = arith.constant 0 : index
    %c0_1 = arith.constant 0 : index
    %3 = vector.load %arg2[%c0, %c0_1] : memref<256x1xi32, #tpu.memory_space<vmem>>, vector<256x1xi32>
    %c0_2 = arith.constant 0 : index
    %c0_3 = arith.constant 0 : index
    %4 = vector.load %arg3[%c0_2, %c0_3] : memref<256x1xi32, #tpu.memory_space<vmem>>, vector<256x1xi32>
    %c0_4 = arith.constant 0 : index
    %c0_5 = arith.constant 0 : index
    %5 = vector.load %arg4[%c0_4, %c0_5] : memref<1x256xi32, #tpu.memory_space<vmem>>, vector<1x256xi32>
    %c0_6 = arith.constant 0 : index
    %c0_7 = arith.constant 0 : index
    %6 = vector.load %arg1[%c0_6, %c0_7] : memref<16x128xf32, #tpu.memory_space<vmem>>, vector<16x128xf32>
    %7 = tpu.iota {dimensions = array<i32: 1>} : vector<256x16xi32>
    %8 = vector.broadcast %3 : vector<256x1xi32> to vector<256x16xi32>
    %9 = arith.cmpi eq, %7, %8 : vector<256x16xi32>
    %10 = arith.extui %9 : vector<256x16xi1> to vector<256x16xi32>
    %11 = arith.sitofp %10 : vector<256x16xi32> to vector<256x16xf32>
    %12 = vector.broadcast %4 : vector<256x1xi32> to vector<256x16xi32>
    %13 = arith.cmpi eq, %7, %12 : vector<256x16xi32>
    %14 = arith.extui %13 : vector<256x16xi1> to vector<256x16xi32>
    %15 = arith.sitofp %14 : vector<256x16xi32> to vector<256x16xf32>
    %cst = arith.constant dense<0.000000e+00> : vector<256x128xf32>
    %16 = tpu.matmul %11, %6, %cst {dimension_numbers = #tpu.dot_dimension_numbers<[1], [0], [0], [1], [0, 0, 1, 1], [], []>} : vector<256x16xf32>, vector<16x128xf32>, vector<256x128xf32> -> vector<256x128xf32>
    %cst_8 = arith.constant dense<0.000000e+00> : vector<256x128xf32>
    %17 = tpu.matmul %15, %6, %cst_8 {dimension_numbers = #tpu.dot_dimension_numbers<[1], [0], [0], [1], [0, 0, 1, 1], [], []>} : vector<256x16xf32>, vector<16x128xf32>, vector<256x128xf32> -> vector<256x128xf32>
    %c0_9 = arith.constant 0 : index
    %c0_10 = arith.constant 0 : index
    %18 = vector.load %arg5[%c0_9, %c0_10] : memref<128x128xf32, #tpu.memory_space<vmem>>, vector<128x128xf32>
    %cst_11 = arith.constant dense<0.000000e+00> : vector<256x128xf32>
    %19 = tpu.matmul %16, %18, %cst_11 {dimension_numbers = #tpu.dot_dimension_numbers<[1], [0], [0], [1], [0, 0, 1, 1], [], []>} : vector<256x128xf32>, vector<128x128xf32>, vector<256x128xf32> -> vector<256x128xf32>
    %c0_12 = arith.constant 0 : index
    %c0_13 = arith.constant 0 : index
    %20 = vector.load %arg6[%c0_12, %c0_13] : memref<128x128xf32, #tpu.memory_space<vmem>>, vector<128x128xf32>
    %cst_14 = arith.constant dense<0.000000e+00> : vector<256x128xf32>
    %21 = tpu.matmul %17, %20, %cst_14 {dimension_numbers = #tpu.dot_dimension_numbers<[1], [0], [0], [1], [0, 0, 1, 1], [], []>} : vector<256x128xf32>, vector<128x128xf32>, vector<256x128xf32> -> vector<256x128xf32>
    %22 = arith.addf %19, %21 : vector<256x128xf32>
    %c0_15 = arith.constant 0 : index
    %c0_16 = arith.constant 0 : index
    %23 = vector.load %arg7[%c0_15, %c0_16] : memref<1x128xf32, #tpu.memory_space<vmem>>, vector<1x128xf32>
    %24 = vector.broadcast %23 : vector<1x128xf32> to vector<256x128xf32>
    %25 = arith.addf %22, %24 : vector<256x128xf32>
    %cst_17 = arith.constant 0.000000e+00 : f32
    %26 = vector.broadcast %cst_17 : f32 to vector<256x128xf32>
    %27 = arith.maximumf %25, %26 : vector<256x128xf32>
    %c0_18 = arith.constant 0 : index
    %c0_19 = arith.constant 0 : index
    %28 = vector.load %arg8[%c0_18, %c0_19] : memref<128x128xf32, #tpu.memory_space<vmem>>, vector<128x128xf32>
    %cst_20 = arith.constant dense<0.000000e+00> : vector<256x128xf32>
    %29 = tpu.matmul %27, %28, %cst_20 {dimension_numbers = #tpu.dot_dimension_numbers<[1], [0], [0], [1], [0, 0, 1, 1], [], []>} : vector<256x128xf32>, vector<128x128xf32>, vector<256x128xf32> -> vector<256x128xf32>
    %c0_21 = arith.constant 0 : index
    %c0_22 = arith.constant 0 : index
    %30 = vector.load %arg9[%c0_21, %c0_22] : memref<1x128xf32, #tpu.memory_space<vmem>>, vector<1x128xf32>
    %31 = vector.broadcast %30 : vector<1x128xf32> to vector<256x128xf32>
    %32 = arith.addf %29, %31 : vector<256x128xf32>
    %cst_23 = arith.constant 0.000000e+00 : f32
    %33 = vector.broadcast %cst_23 : f32 to vector<256x128xf32>
    %34 = arith.maximumf %32, %33 : vector<256x128xf32>
    %35 = tpu.iota {dimensions = array<i32: 0>} : vector<16x256xi32>
    %36 = vector.broadcast %5 : vector<1x256xi32> to vector<16x256xi32>
    %37 = arith.cmpi eq, %35, %36 : vector<16x256xi32>
    %38 = arith.extui %37 : vector<16x256xi1> to vector<16x256xi32>
    %39 = arith.sitofp %38 : vector<16x256xi32> to vector<16x256xf32>
    %c0_24 = arith.constant 0 : index
    %c0_25 = arith.constant 0 : index
    %40 = vector.load %arg18[%c0_24, %c0_25] : memref<16x128xf32, #tpu.memory_space<vmem>>, vector<16x128xf32>
    %cst_26 = arith.constant dense<0.000000e+00> : vector<16x128xf32>
    %41 = tpu.matmul %39, %34, %cst_26 {dimension_numbers = #tpu.dot_dimension_numbers<[1], [0], [0], [1], [0, 0, 1, 1], [], []>} : vector<16x256xf32>, vector<256x128xf32>, vector<16x128xf32> -> vector<16x128xf32>
    %42 = arith.addf %40, %41 : vector<16x128xf32>
    %c0_27 = arith.constant 0 : index
    %c0_28 = arith.constant 0 : index
    %43 = vector.load %arg18[%c0_27, %c0_28] : memref<16x128xf32, #tpu.memory_space<vmem>>, vector<16x128xf32>
    tpu.vector_store %arg18[%c0_27, %c0_28], %42 {strides = array<i32>} : memref<16x128xf32, #tpu.memory_space<vmem>>, vector<16x128xf32>,
    %c0_i32_29 = arith.constant 0 : i32
    %44 = arith.cmpi eq, %arg0, %c0_i32_29 : i32
    %45 = arith.extui %44 : i1 to i32
    %c0_i32_30 = arith.constant 0 : i32
    %46 = arith.cmpi ne, %45, %c0_i32_30 : i32
    scf.if %46 {
      %c0_31 = arith.constant 0 : index
      %c0_32 = arith.constant 0 : index
      %47 = vector.load %arg1[%c0_31, %c0_32] : memref<16x128xf32, #tpu.memory_space<vmem>>, vector<16x128xf32>
      %c0_33 = arith.constant 0 : index
      %c0_34 = arith.constant 0 : index
      %48 = vector.load %arg11[%c0_33, %c0_34] : memref<128x128xf32, #tpu.memory_space<vmem>>, vector<128x128xf32>
      %cst_35 = arith.constant dense<0.000000e+00> : vector<16x128xf32>
      %49 = tpu.matmul %47, %48, %cst_35 {dimension_numbers = #tpu.dot_dimension_numbers<[1], [0], [0], [1], [0, 0, 1, 1], [], []>} : vector<16x128xf32>, vector<128x128xf32>, vector<16x128xf32> -> vector<16x128xf32>
      %c0_36 = arith.constant 0 : index
      %c0_37 = arith.constant 0 : index
      %50 = vector.load %arg18[%c0_36, %c0_37] : memref<16x128xf32, #tpu.memory_space<vmem>>, vector<16x128xf32>
      %c0_38 = arith.constant 0 : index
      %c0_39 = arith.constant 0 : index
      %51 = vector.load %arg12[%c0_38, %c0_39] : memref<128x128xf32, #tpu.memory_space<vmem>>, vector<128x128xf32>
      %cst_40 = arith.constant dense<0.000000e+00> : vector<16x128xf32>
      %52 = tpu.matmul %50, %51, %cst_40 {dimension_numbers = #tpu.dot_dimension_numbers<[1], [0], [0], [1], [0, 0, 1, 1], [], []>} : vector<16x128xf32>, vector<128x128xf32>, vector<16x128xf32> -> vector<16x128xf32>
      %53 = arith.addf %49, %52 : vector<16x128xf32>
      %c0_41 = arith.constant 0 : index
      %c0_42 = arith.constant 0 : index
      %54 = vector.load %arg10[%c0_41, %c0_42] : memref<16x128xf32, #tpu.memory_space<vmem>>, vector<16x128xf32>
      %c0_43 = arith.constant 0 : index
      %c0_44 = arith.constant 0 : index
      %55 = vector.load %arg13[%c0_43, %c0_44] : memref<128x128xf32, #tpu.memory_space<vmem>>, vector<128x128xf32>
      %cst_45 = arith.constant dense<0.000000e+00> : vector<16x128xf32>
      %56 = tpu.matmul %54, %55, %cst_45 {dimension_numbers = #tpu.dot_dimension_numbers<[1], [0], [0], [1], [0, 0, 1, 1], [], []>} : vector<16x128xf32>, vector<128x128xf32>, vector<16x128xf32> -> vector<16x128xf32>
      %57 = arith.addf %53, %56 : vector<16x128xf32>
      %c0_46 = arith.constant 0 : index
      %c0_47 = arith.constant 0 : index
      %58 = vector.load %arg14[%c0_46, %c0_47] : memref<1x128xf32, #tpu.memory_space<vmem>>, vector<1x128xf32>
      %59 = vector.broadcast %58 : vector<1x128xf32> to vector<16x128xf32>
      %60 = arith.addf %57, %59 : vector<16x128xf32>
      %cst_48 = arith.constant 0.000000e+00 : f32
      %61 = vector.broadcast %cst_48 : f32 to vector<16x128xf32>
      %62 = arith.maximumf %60, %61 : vector<16x128xf32>
      %c0_49 = arith.constant 0 : index
      %c0_50 = arith.constant 0 : index
      %63 = vector.load %arg15[%c0_49, %c0_50] : memref<128x128xf32, #tpu.memory_space<vmem>>, vector<128x128xf32>
      %cst_51 = arith.constant dense<0.000000e+00> : vector<16x128xf32>
      %64 = tpu.matmul %62, %63, %cst_51 {dimension_numbers = #tpu.dot_dimension_numbers<[1], [0], [0], [1], [0, 0, 1, 1], [], []>} : vector<16x128xf32>, vector<128x128xf32>, vector<16x128xf32> -> vector<16x128xf32>
      %c0_52 = arith.constant 0 : index
      %c0_53 = arith.constant 0 : index
      %65 = vector.load %arg16[%c0_52, %c0_53] : memref<1x128xf32, #tpu.memory_space<vmem>>, vector<1x128xf32>
      %66 = vector.broadcast %65 : vector<1x128xf32> to vector<16x128xf32>
      %67 = arith.addf %64, %66 : vector<16x128xf32>
      %cst_54 = arith.constant 0.000000e+00 : f32
      %68 = vector.broadcast %cst_54 : f32 to vector<16x128xf32>
      %69 = arith.maximumf %67, %68 : vector<16x128xf32>
      %c0_55 = arith.constant 0 : index
      %c0_56 = arith.constant 0 : index
      %70 = vector.load %arg17[%c0_55, %c0_56] : memref<16x128xf32, #tpu.memory_space<vmem>>, vector<16x128xf32>
      tpu.vector_store %arg17[%c0_55, %c0_56], %69 {strides = array<i32>} : memref<16x128xf32, #tpu.memory_space<vmem>>, vector<16x128xf32>,
    } else {
    }
    return
  }
  func.func @transform_0(%arg0: i32) -> (i32, i32) {
    %c0_i32 = arith.constant 0 : i32
    %c0_i32_0 = arith.constant 0 : i32
    %c0_i32_1 = arith.constant 0 : i32
    return %c0_i32, %c0_i32_0 : i32, i32
  }
  func.func @transform_1(%arg0: i32) -> (i32, i32) {
    %c0_i32 = arith.constant 0 : i32
    %c0_i32_0 = arith.constant 0 : i32
    return %arg0, %c0_i32 : i32, i32
  }
  func.func @transform_2(%arg0: i32) -> (i32, i32) {
    %c0_i32 = arith.constant 0 : i32
    %c0_i32_0 = arith.constant 0 : i32
    return %arg0, %c0_i32 : i32, i32
  }
  func.func @transform_3(%arg0: i32) -> (i32, i32) {
    %c0_i32 = arith.constant 0 : i32
    %c0_i32_0 = arith.constant 0 : i32
    return %c0_i32, %arg0 : i32, i32
  }
  func.func @transform_4(%arg0: i32) -> (i32, i32) {
    %c0_i32 = arith.constant 0 : i32
    %c0_i32_0 = arith.constant 0 : i32
    %c0_i32_1 = arith.constant 0 : i32
    return %c0_i32, %c0_i32_0 : i32, i32
  }
  func.func @transform_5(%arg0: i32) -> (i32, i32) {
    %c0_i32 = arith.constant 0 : i32
    %c0_i32_0 = arith.constant 0 : i32
    %c0_i32_1 = arith.constant 0 : i32
    return %c0_i32, %c0_i32_0 : i32, i32
  }
  func.func @transform_6(%arg0: i32) -> (i32, i32) {
    %c0_i32 = arith.constant 0 : i32
    %c0_i32_0 = arith.constant 0 : i32
    %c0_i32_1 = arith.constant 0 : i32
    return %c0_i32, %c0_i32_0 : i32, i32
  }
  func.func @transform_7(%arg0: i32) -> (i32, i32) {
    %c0_i32 = arith.constant 0 : i32
    %c0_i32_0 = arith.constant 0 : i32
    %c0_i32_1 = arith.constant 0 : i32
    return %c0_i32, %c0_i32_0 : i32, i32
  }
  func.func @transform_8(%arg0: i32) -> (i32, i32) {
    %c0_i32 = arith.constant 0 : i32
    %c0_i32_0 = arith.constant 0 : i32
    %c0_i32_1 = arith.constant 0 : i32
    return %c0_i32, %c0_i32_0 : i32, i32
  }
  func.func @transform_9(%arg0: i32) -> (i32, i32) {
    %c0_i32 = arith.constant 0 : i32
    %c0_i32_0 = arith.constant 0 : i32
    %c0_i32_1 = arith.constant 0 : i32
    return %c0_i32, %c0_i32_0 : i32, i32
  }
  func.func @transform_10(%arg0: i32) -> (i32, i32) {
    %c0_i32 = arith.constant 0 : i32
    %c0_i32_0 = arith.constant 0 : i32
    %c0_i32_1 = arith.constant 0 : i32
    return %c0_i32, %c0_i32_0 : i32, i32
  }
  func.func @transform_11(%arg0: i32) -> (i32, i32) {
    %c0_i32 = arith.constant 0 : i32
    %c0_i32_0 = arith.constant 0 : i32
    %c0_i32_1 = arith.constant 0 : i32
    return %c0_i32, %c0_i32_0 : i32, i32
  }
  func.func @transform_12(%arg0: i32) -> (i32, i32) {
    %c0_i32 = arith.constant 0 : i32
    %c0_i32_0 = arith.constant 0 : i32
    %c0_i32_1 = arith.constant 0 : i32
    return %c0_i32, %c0_i32_0 : i32, i32
  }
  func.func @transform_13(%arg0: i32) -> (i32, i32) {
    %c0_i32 = arith.constant 0 : i32
    %c0_i32_0 = arith.constant 0 : i32
    %c0_i32_1 = arith.constant 0 : i32
    return %c0_i32, %c0_i32_0 : i32, i32
  }
  func.func @transform_14(%arg0: i32) -> (i32, i32) {
    %c0_i32 = arith.constant 0 : i32
    %c0_i32_0 = arith.constant 0 : i32
    %c0_i32_1 = arith.constant 0 : i32
    return %c0_i32, %c0_i32_0 : i32, i32
  }
  func.func @transform_15(%arg0: i32) -> (i32, i32) {
    %c0_i32 = arith.constant 0 : i32
    %c0_i32_0 = arith.constant 0 : i32
    %c0_i32_1 = arith.constant 0 : i32
    return %c0_i32, %c0_i32_0 : i32, i32
  }
  func.func @transform_16(%arg0: i32) -> (i32, i32) {
    %c0_i32 = arith.constant 0 : i32
    %c0_i32_0 = arith.constant 0 : i32
    %c0_i32_1 = arith.constant 0 : i32
    return %c0_i32, %c0_i32_0 : i32, i32
  }
}

</mosaic_0001>

<llo_original>
// kernel: _lambda_.2
$region0: #{_lambda_.2}
  #allocation0 [shape = 'u32[]', space=smem, size = 0x4, offset = 0x4, fixed_abs, tag = 'smem constant byte address 0x4 - core index']
  #allocation1 [shape = 'u32[72,128]{1,0:T(1,128)}', space=vmem, size = 0x9000, scoped, tag = 'internal scratch']
  #allocation2 [shape = 's32[1]{0}', space=sflag, size = 0x4, scoped, tag = 'scoped memory for _lambda_.2']
  #allocation3 [shape = 'u8[512]{0}', space=smem, size = 0x200, scoped, tag = 'prefetched SMEM operand 0']
  %s0 = inlined_call_operand.vmem [shape: s32[2], index: 0, kind: input, shape index: {}]
  %s1 = inlined_call_operand.vmem [shape: f32[1,8,128], index: 1, kind: input, shape index: {}]
  %s2 = inlined_call_operand.vmem [shape: f32[1,8,128], index: 2, kind: input, shape index: {}]
  %s3 = inlined_call_operand.vmem [shape: f32[1,8,128], index: 3, kind: output, shape index: {0}]
  %s4 = inlined_call_operand.vmem [shape: f32[1,8,128], index: 4, kind: output, shape index: {1}]
  %5 = xla_tuple %s3, %s4
  %s6 = sld [smem:[#allocation0]]
  $region26: #{_lambda_.2} parent=0
    _
  %s8 = ssub.s32 1, %s6
  %s9 = scalar_select 0, %s8, %s6
  %s11 = sshll.u32 %s0, 4
  %s12 = int_to_ptr.vmem [resolvable:$true] %s11
  %14 = dma.vmem_to_smem %s12, 16, [#allocation3], [#allocation2]
  %16 = dma.done [#allocation2], 16
  %17 = sfence
  // Predicated region
  $region2: #{_lambda_.2} parent=0 // pred_check
    _
  $region3: #{_lambda_.2} parent=0 // pred_check_branch
    %19 = sbr.rel (0) target = $region5
  $region4: #{_lambda_.2} parent=0 // pred_region
    _
  $region5: #{_lambda_.2} parent=0 // pred_fallthru
    _
  // Predicated region
  $region6: #{_lambda_.2} parent=0 // pred_check
    _
  $region7: #{_lambda_.2} parent=0 // pred_check_branch
    %21 = sbr.rel (0) target = $region9
  $region8: #{_lambda_.2} parent=0 // pred_region
    _
  $region9: #{_lambda_.2} parent=0 // pred_fallthru
    _
  %s22 = smul.u32 0, 2
  %s23 = sld [smem:[#allocation3 + %s22]]
  %s24 = sadd.s32 %s22, 1
  %s25 = sld [smem:[#allocation3 + %s24]]
  %v26 = vld [vmem:[%s1] sm:$0xff]
  %v27 = vld [vmem:[%s2] sm:$0xff]
  %v28 = vmul.f32 %v26, %v26
  %29 = vadd.xlane.f32.xlu0 %v28
  %v30 = vpop.xlane.xlu0 %29
  %v31 = vmax.f32 %v30, 1e-24
  %v32 = vrsqrt.pop %v31
  %v33 = vmul.f32 %v32, %v31
  %v34 = vmul.f32 %v33, %v32
  %v35 = vmul.f32 0.5, %v34
  %v36 = vsub.f32 1.5, %v35
  %v37 = vmul.f32 %v32, %v36
  %vm38 = vweird.f32 %v31
  %vm39 = vweird.f32 %v32
  %vm40 = vmor %vm38, %vm39
  %v41 = vsel %vm40, %v32, %v37
  %v42 = vmul.f32 %v27, %v27
  %43 = vadd.xlane.f32.xlu0 %v42
  %v44 = vpop.xlane.xlu0 %43
  %v45 = vmax.f32 %v44, 1e-24
  %v46 = vrsqrt.pop %v45
  %v47 = vmul.f32 %v46, %v45
  %v48 = vmul.f32 %v47, %v46
  %v49 = vmul.f32 0.5, %v48
  %v50 = vsub.f32 1.5, %v49
  %v51 = vmul.f32 %v46, %v50
  %vm52 = vweird.f32 %v45
  %vm53 = vweird.f32 %v46
  %vm54 = vmor %vm52, %vm53
  %v55 = vsel %vm54, %v46, %v51
  %v56 = vmul.f32 %v26, %v41
  %v57 = vmul.f32 %v27, %v55
  %58 = vmatpush.xpose.msra.mxu0 0.0
  %59 = vmatpush.xpose.msra.mxu0 0.0
  %60 = vmatpush.xpose.msra.mxu0 0.0
  %61 = vmatpush.xpose.msra.mxu0 0.0
  %62 = vmatpush.xpose.msra.mxu0 0.0
  %63 = vmatpush.xpose.msra.mxu0 0.0
  %64 = vmatpush.xpose.msra.mxu0 0.0
  %65 = vmatpush.xpose.msra.mxu0 0.0
  %66 = vmatpush.xpose.msra.mxu0 0.0
  %67 = vmatpush.xpose.msra.mxu0 0.0
  %68 = vmatpush.xpose.msra.mxu0 0.0
  %69 = vmatpush.xpose.msra.mxu0 0.0
  %70 = vmatpush.xpose.msra.mxu0 0.0
  %71 = vmatpush.xpose.msra.mxu0 0.0
  %72 = vmatpush.xpose.msra.mxu0 0.0
  %73 = vmatpush.xpose.msra.mxu0 %v57
  %74 = vmatmul.f32.gmra.mxu0 %v56
  %v75 = vpop.f32.mrf.mxu0
  %v76 = vadd.f32 0.0, %v75
  %77 = vdwg.mxu0
  %78 = vmatpush.xpose.msra.mxu0 0.0
  %79 = vmatpush.xpose.msra.mxu0 0.0
  %80 = vmatpush.xpose.msra.mxu0 0.0
  %81 = vmatpush.xpose.msra.mxu0 0.0
  %82 = vmatpush.xpose.msra.mxu0 0.0
  %83 = vmatpush.xpose.msra.mxu0 0.0
  %84 = vmatpush.xpose.msra.mxu0 0.0
  %85 = vmatpush.xpose.msra.mxu0 0.0
  %86 = vmatpush.xpose.msra.mxu0 0.0
  %87 = vmatpush.xpose.msra.mxu0 0.0
  %88 = vmatpush.xpose.msra.mxu0 0.0
  %89 = vmatpush.xpose.msra.mxu0 0.0
  %90 = vmatpush.xpose.msra.mxu0 0.0
  %91 = vmatpush.xpose.msra.mxu0 0.0
  %92 = vmatpush.xpose.msra.mxu0 0.0
  %93 = vmatpush.xpose.msra.mxu0 %v56
  %94 = vmatmul.f32.gmra.mxu0 %v57
  %v95 = vpop.f32.mrf.mxu0
  %v96 = vadd.f32 0.0, %v95
  %97 = vdwg.mxu0
  %v98 = vlaneseq
  %v99 = vand.u32 %v98, 127
  %v100 = vstv %s25
  %vm101 = vcmp.lt.s32.totalorder %v99, %v100
  %v102 = vsel %vm101, %v76, -1e+30
  %v103 = vstv %s23
  %vm104 = vcmp.lt.s32.totalorder %v99, %v103
  %v105 = vsel %vm104, %v96, -1e+30
  %vm106 = vcmask 64512
  %v107 = vsel %vm106, %v102, -inf
  %108 = vmax.xlane.f32.xlu0 %v107
  %v109 = vpop.xlane.xlu0 %108
  %v110 = vsub.f32 %v102, %v109
  %v111 = vmul.f32 %v110, 1.442695
  %v112 = vpow.pop %v111
  %v113 = vsel %vm106, %v112, 0.0
  %114 = vadd.xlane.f32.xlu0 %v113
  %v115 = vpop.xlane.xlu0 %114
  %v116 = vrcp.pop %v115
  %v117 = vmul.f32 %v115, %v116
  %v118 = vsub.f32 1.0, %v117
  %v119 = vmul.f32 %v116, %v118
  %v120 = vadd.f32 %v116, %v119
  %vm121 = vweird.f32 %v115
  %vm122 = vweird.f32 %v116
  %vm123 = vmor %vm121, %vm122
  %v124 = vsel %vm123, %v116, %v120
  %v125 = vand.u32 2147483647, %v115
  %vm126 = vcmp.eq.f32.partialorder %v125, 8.507059e+37
  %v127 = vand.u32 %v115, 2147483648
  %v128 = vor.u32 1.1754944e-38, %v127
  %v129 = vsel %vm126, %v128, %v124
  %v130 = vmul.f32 %v112, %v129
  %v131 = vsel %vm106, %v105, -inf
  %132 = vmax.xlane.f32.xlu0 %v131
  %v133 = vpop.xlane.xlu0 %132
  %v134 = vsub.f32 %v105, %v133
  %v135 = vmul.f32 %v134, 1.442695
  %v136 = vpow.pop %v135
  %v137 = vsel %vm106, %v136, 0.0
  %138 = vadd.xlane.f32.xlu0 %v137
  %v139 = vpop.xlane.xlu0 %138
  %v140 = vrcp.pop %v139
  %v141 = vmul.f32 %v139, %v140
  %v142 = vsub.f32 1.0, %v141
  %v143 = vmul.f32 %v140, %v142
  %v144 = vadd.f32 %v140, %v143
  %vm145 = vweird.f32 %v139
  %vm146 = vweird.f32 %v140
  %vm147 = vmor %vm145, %vm146
  %v148 = vsel %vm147, %v140, %v144
  %v149 = vand.u32 2147483647, %v139
  %vm150 = vcmp.eq.f32.partialorder %v149, 8.507059e+37
  %v151 = vand.u32 %v139, 2147483648
  %v152 = vor.u32 1.1754944e-38, %v151
  %v153 = vsel %vm150, %v152, %v148
  %v154 = vmul.f32 %v136, %v153
  %v156 = vsel %vm106, %v130, 0
  %158 = vmatpush.msra.mxu0 0.0
  %159 = vmatpush.msra.mxu0 0.0
  %160 = vmatpush.msra.mxu0 0.0
  %161 = vmatpush.msra.mxu0 0.0
  %162 = vmatpush.msra.mxu0 0.0
  %163 = vmatpush.msra.mxu0 0.0
  %164 = vmatpush.msra.mxu0 0.0
  %165 = vmatpush.msra.mxu0 0.0
  %166 = vmatpush.msra.mxu0 0.0
  %167 = vmatpush.msra.mxu0 0.0
  %168 = vmatpush.msra.mxu0 0.0
  %169 = vmatpush.msra.mxu0 0.0
  %170 = vmatpush.msra.mxu0 0.0
  %171 = vmatpush.msra.mxu0 0.0
  %172 = vmatpush.msra.mxu0 0.0
  %173 = vmatpush.msra.mxu0 %v27
  %174 = vmatmul.f32.gmra.mxu0 %v156
  %v175 = vpop.f32.mrf.mxu0
  %v176 = vadd.f32 0.0, %v175
  %177 = vdwg.mxu0
  %v178 = vsub.f32 %v26, %v176
  %179 = vst [vmem:[%s3] sm:$0xff] %v178
  %v181 = vsel %vm106, %v154, 0
  %183 = vmatpush.msra.mxu0 0.0
  %184 = vmatpush.msra.mxu0 0.0
  %185 = vmatpush.msra.mxu0 0.0
  %186 = vmatpush.msra.mxu0 0.0
  %187 = vmatpush.msra.mxu0 0.0
  %188 = vmatpush.msra.mxu0 0.0
  %189 = vmatpush.msra.mxu0 0.0
  %190 = vmatpush.msra.mxu0 0.0
  %191 = vmatpush.msra.mxu0 0.0
  %192 = vmatpush.msra.mxu0 0.0
  %193 = vmatpush.msra.mxu0 0.0
  %194 = vmatpush.msra.mxu0 0.0
  %195 = vmatpush.msra.mxu0 0.0
  %196 = vmatpush.msra.mxu0 0.0
  %197 = vmatpush.msra.mxu0 0.0
  %198 = vmatpush.msra.mxu0 %v26
  %199 = vmatmul.f32.gmra.mxu0 %v181
  %v200 = vpop.f32.mrf.mxu0
  %v201 = vadd.f32 0.0, %v200
  %202 = vdwg.mxu0
  %v203 = vsub.f32 %v27, %v201
  %204 = vst [vmem:[%s4] sm:$0xff] %v203
  // Predicated region
  $region10: #{_lambda_.2} parent=0 // pred_check
    _
  $region11: #{_lambda_.2} parent=0 // pred_check_branch
    %206 = sbr.rel (0) target = $region13
  $region12: #{_lambda_.2} parent=0 // pred_region
    _
  $region13: #{_lambda_.2} parent=0 // pred_fallthru
    _
  // Predicated region
  $region14: #{_lambda_.2} parent=0 // pred_check
    _
  $region15: #{_lambda_.2} parent=0 // pred_check_branch
    %208 = sbr.rel (0) target = $region17
  $region16: #{_lambda_.2} parent=0 // pred_region
    _
  $region17: #{_lambda_.2} parent=0 // pred_fallthru
    _
  // Predicated region
  $region18: #{_lambda_.2} parent=0 // pred_check
    _
  $region19: #{_lambda_.2} parent=0 // pred_check_branch
    %210 = sbr.rel (0) target = $region21
  $region20: #{_lambda_.2} parent=0 // pred_region
    _
  $region21: #{_lambda_.2} parent=0 // pred_fallthru
    _
  // Predicated region
  $region22: #{_lambda_.2} parent=0 // pred_check
    _
  $region23: #{_lambda_.2} parent=0 // pred_check_branch
    %212 = sbr.rel (0) target = $region25
  $region24: #{_lambda_.2} parent=0 // pred_region
    _
  $region25: #{_lambda_.2} parent=0 // pred_fallthru
    _

// kernel: _lambda_.3
$region0: #{_lambda_.3}
  #allocation0 [shape = 'u32[]', space=smem, size = 0x4, offset = 0x4, fixed_abs, tag = 'smem constant byte address 0x4 - core index']
  #allocation1 [shape = 'u32[72,128]{1,0:T(1,128)}', space=vmem, size = 0x9000, scoped, tag = 'internal scratch']
  #allocation2 [shape = 'f32[16,128]{1,0:T(8,128)}', space=vmem, size = 0x2000, scoped, tag = 'scratch operand']
  %s0 = inlined_call_operand.vmem [shape: f32[16,128], index: 0, kind: input, shape index: {}]
  %s1 = inlined_call_operand.vmem [shape: s32[256,1], index: 1, kind: input, shape index: {}]
  %s2 = inlined_call_operand.vmem [shape: s32[256,1], index: 2, kind: input, shape index: {}]
  %s3 = inlined_call_operand.vmem [shape: s32[1,256], index: 3, kind: input, shape index: {}]
  %s4 = inlined_call_operand.vmem [shape: f32[128,128], index: 4, kind: input, shape index: {}]
  %s5 = inlined_call_operand.vmem [shape: f32[128,128], index: 5, kind: input, shape index: {}]
  %s6 = inlined_call_operand.vmem [shape: f32[1,128], index: 6, kind: input, shape index: {}]
  %s7 = inlined_call_operand.vmem [shape: f32[128,128], index: 7, kind: input, shape index: {}]
  %s8 = inlined_call_operand.vmem [shape: f32[1,128], index: 8, kind: input, shape index: {}]
  %s9 = inlined_call_operand.vmem [shape: f32[16,128], index: 9, kind: input, shape index: {}]
  %s10 = inlined_call_operand.vmem [shape: f32[128,128], index: 10, kind: input, shape index: {}]
  %s11 = inlined_call_operand.vmem [shape: f32[128,128], index: 11, kind: input, shape index: {}]
  %s12 = inlined_call_operand.vmem [shape: f32[128,128], index: 12, kind: input, shape index: {}]
  %s13 = inlined_call_operand.vmem [shape: f32[1,128], index: 13, kind: input, shape index: {}]
  %s14 = inlined_call_operand.vmem [shape: f32[128,128], index: 14, kind: input, shape index: {}]
  %s15 = inlined_call_operand.vmem [shape: f32[1,128], index: 15, kind: input, shape index: {}]
  %s16 = inlined_call_operand.hbm [shape: f32[16,128], index: 16, kind: output, shape index: {}]
  %s17 = sld [smem:[#allocation0]]
  $region82: #{_lambda_.3} parent=0
    _
  %s19 = ssub.s32 1, %s17
  %s20 = scalar_select 0, %s19, %s17
  $region1: #{_lambda_.3} parent=0
    #allocation3 [shape = 'u8[8192]{0}', space=vmem, size = 0x2000, scoped, tag = 'output window, operand 0, single buffered']
    #allocation4 [shape = 's32[1]{0}', space=sflag, size = 0x4, scoped, tag = 'scoped memory for _lambda_.3']
    %21 = vsyncpa [#allocation4], 0
    // Predicated region
    $region2: #{_lambda_.3} parent=1 // pred_check
      _
    $region3: #{_lambda_.3} parent=1 // pred_check_branch
      %23 = sbr.rel (0) target = $region5
    $region4: #{_lambda_.3} parent=1 // pred_region
      _
    $region5: #{_lambda_.3} parent=1 // pred_fallthru
      _
    // Predicated region
    $region6: #{_lambda_.3} parent=1 // pred_check
      _
    $region7: #{_lambda_.3} parent=1 // pred_check_branch
      %25 = sbr.rel (0) target = $region9
    $region8: #{_lambda_.3} parent=1 // pred_region
      _
    $region9: #{_lambda_.3} parent=1 // pred_fallthru
      _
    // Predicated region
    $region10: #{_lambda_.3} parent=1 // pred_check
      _
    $region11: #{_lambda_.3} parent=1 // pred_check_branch
      %27 = sbr.rel (0) target = $region13
    $region12: #{_lambda_.3} parent=1 // pred_region
      _
    $region13: #{_lambda_.3} parent=1 // pred_fallthru
      _
    // Predicated region
    $region14: #{_lambda_.3} parent=1 // pred_check
      _
    $region15: #{_lambda_.3} parent=1 // pred_check_branch
      %29 = sbr.rel (0) target = $region17
    $region16: #{_lambda_.3} parent=1 // pred_region
      _
    $region17: #{_lambda_.3} parent=1 // pred_fallthru
      _
    // Predicated region
    $region18: #{_lambda_.3} parent=1 // pred_check
      _
    $region19: #{_lambda_.3} parent=1 // pred_check_branch
      %31 = sbr.rel (0) target = $region21
    $region20: #{_lambda_.3} parent=1 // pred_region
      _
    $region21: #{_lambda_.3} parent=1 // pred_fallthru
      _
    // Predicated region
    $region22: #{_lambda_.3} parent=1 // pred_check
      _
    $region23: #{_lambda_.3} parent=1 // pred_check_branch
      %33 = sbr.rel (0) target = $region25
    $region24: #{_lambda_.3} parent=1 // pred_region
      _
    $region25: #{_lambda_.3} parent=1 // pred_fallthru
      _
    // Predicated region
    $region26: #{_lambda_.3} parent=1 // pred_check
      _
    $region27: #{_lambda_.3} parent=1 // pred_check_branch
      %35 = sbr.rel (0) target = $region29
    $region28: #{_lambda_.3} parent=1 // pred_region
      _
    $region29: #{_lambda_.3} parent=1 // pred_fallthru
      _
    // Predicated region
    $region30: #{_lambda_.3} parent=1 // pred_check
      _
    $region31: #{_lambda_.3} parent=1 // pred_check_branch
      %37 = sbr.rel (0) target = $region33
    $region32: #{_lambda_.3} parent=1 // pred_region
      _
    $region33: #{_lambda_.3} parent=1 // pred_fallthru
      _
    // Predicated region
    $region34: #{_lambda_.3} parent=1 // pred_check
      _
    $region35: #{_lambda_.3} parent=1 // pred_check_branch
      %39 = sbr.rel (0) target = $region37
    $region36: #{_lambda_.3} parent=1 // pred_region
      _
    $region37: #{_lambda_.3} parent=1 // pred_fallthru
      _
    // Predicated region
    $region38: #{_lambda_.3} parent=1 // pred_check
      _
    $region39: #{_lambda_.3} parent=1 // pred_check_branch
      %41 = sbr.rel (0) target = $region41
    $region40: #{_lambda_.3} parent=1 // pred_region
      _
    $region41: #{_lambda_.3} parent=1 // pred_fallthru
      _
    // Predicated region
    $region42: #{_lambda_.3} parent=1 // pred_check
      _
    $region43: #{_lambda_.3} parent=1 // pred_check_branch
      %43 = sbr.rel (0) target = $region45
    $region44: #{_lambda_.3} parent=1 // pred_region
      _
    $region45: #{_lambda_.3} parent=1 // pred_fallthru
      _
    // Predicated region
    $region46: #{_lambda_.3} parent=1 // pred_check
      _
    $region47: #{_lambda_.3} parent=1 // pred_check_branch
      %45 = sbr.rel (0) target = $region49
    $region48: #{_lambda_.3} parent=1 // pred_region
      _
    $region49: #{_lambda_.3} parent=1 // pred_fallthru
      _
    // Predicated region
    $region50: #{_lambda_.3} parent=1 // pred_check
      _
    $region51: #{_lambda_.3} parent=1 // pred_check_branch
      %47 = sbr.rel (0) target = $region53
    $region52: #{_lambda_.3} parent=1 // pred_region
      _
    $region53: #{_lambda_.3} parent=1 // pred_fallthru
      _
    // Predicated region
    $region54: #{_lambda_.3} parent=1 // pred_check
      _
    $region55: #{_lambda_.3} parent=1 // pred_check_branch
      %49 = sbr.rel (0) target = $region57
    $region56: #{_lambda_.3} parent=1 // pred_region
      _
    $region57: #{_lambda_.3} parent=1 // pred_fallthru
      _
    // Predicated region
    $region58: #{_lambda_.3} parent=1 // pred_check
      _
    $region59: #{_lambda_.3} parent=1 // pred_check_branch
      %51 = sbr.rel (0) target = $region61
    $region60: #{_lambda_.3} parent=1 // pred_region
      _
    $region61: #{_lambda_.3} parent=1 // pred_fallthru
      _
    // Predicated region
    $region62: #{_lambda_.3} parent=1 // pred_check
      _
    $region63: #{_lambda_.3} parent=1 // pred_check_branch
      %53 = sbr.rel (0) target = $region65
    $region64: #{_lambda_.3} parent=1 // pred_region
      _
    $region65: #{_lambda_.3} parent=1 // pred_fallthru
      _
    %p54 = scmp.eq.s32.totalorder 0, 0
    // Predicated region
    $region66: #{_lambda_.3} parent=1 // pred_check
      %p55 = pneg %p54
    $region67: #{_lambda_.3} parent=1 // pred_check_branch
      %57 = sbr.rel (%p55) target = $region69
    $region68: #{_lambda_.3} parent=1 // pred_region
      %58 = vst [vmem:[#allocation2] sm:$0xff] 0.0
      %59 = vst [vmem:[#allocation2 + $0x8] sm:$0xff] 0.0
    $region69: #{_lambda_.3} parent=1 // pred_fallthru
      _
    %v60 = vld [vmem:[%s1] sm:$0xff]
    %v61 = vld [vmem:[%s1 + $0x8] sm:$0xff]
    %v62 = vld [vmem:[%s1 + $0x10] sm:$0xff]
    %v63 = vld [vmem:[%s1 + $0x18] sm:$0xff]
    %v64 = vld [vmem:[%s1 + $0x20] sm:$0xff]
    %v65 = vld [vmem:[%s1 + $0x28] sm:$0xff]
    %v66 = vld [vmem:[%s1 + $0x30] sm:$0xff]
    %v67 = vld [vmem:[%s1 + $0x38] sm:$0xff]
    %v68 = vld [vmem:[%s1 + $0x40] sm:$0xff]
    %v69 = vld [vmem:[%s1 + $0x48] sm:$0xff]
    %v70 = vld [vmem:[%s1 + $0x50] sm:$0xff]
    %v71 = vld [vmem:[%s1 + $0x58] sm:$0xff]
    %v72 = vld [vmem:[%s1 + $0x60] sm:$0xff]
    %v73 = vld [vmem:[%s1 + $0x68] sm:$0xff]
    %v74 = vld [vmem:[%s1 + $0x70] sm:$0xff]
    %v75 = vld [vmem:[%s1 + $0x78] sm:$0xff]
    %v76 = vld [vmem:[%s1 + $0x80] sm:$0xff]
    %v77 = vld [vmem:[%s1 + $0x88] sm:$0xff]
    %v78 = vld [vmem:[%s1 + $0x90] sm:$0xff]
    %v79 = vld [vmem:[%s1 + $0x98] sm:$0xff]
    %v80 = vld [vmem:[%s1 + $0xa0] sm:$0xff]
    %v81 = vld [vmem:[%s1 + $0xa8] sm:$0xff]
    %v82 = vld [vmem:[%s1 + $0xb0] sm:$0xff]
    %v83 = vld [vmem:[%s1 + $0xb8] sm:$0xff]
    %v84 = vld [vmem:[%s1 + $0xc0] sm:$0xff]
    %v85 = vld [vmem:[%s1 + $0xc8] sm:$0xff]
    %v86 = vld [vmem:[%s1 + $0xd0] sm:$0xff]
    %v87 = vld [vmem:[%s1 + $0xd8] sm:$0xff]
    %v88 = vld [vmem:[%s1 + $0xe0] sm:$0xff]
    %v89 = vld [vmem:[%s1 + $0xe8] sm:$0xff]
    %v90 = vld [vmem:[%s1 + $0xf0] sm:$0xff]
    %v91 = vld [vmem:[%s1 + $0xf8] sm:$0xff]
    %v92 = vld [vmem:[%s2] sm:$0xff]
    %v93 = vld [vmem:[%s2 + $0x8] sm:$0xff]
    %v94 = vld [vmem:[%s2 + $0x10] sm:$0xff]
    %v95 = vld [vmem:[%s2 + $0x18] sm:$0xff]
    %v96 = vld [vmem:[%s2 + $0x20] sm:$0xff]
    %v97 = vld [vmem:[%s2 + $0x28] sm:$0xff]
    %v98 = vld [vmem:[%s2 + $0x30] sm:$0xff]
    %v99 = vld [vmem:[%s2 + $0x38] sm:$0xff]
    %v100 = vld [vmem:[%s2 + $0x40] sm:$0xff]
    %v101 = vld [vmem:[%s2 + $0x48] sm:$0xff]
    %v102 = vld [vmem:[%s2 + $0x50] sm:$0xff]
    %v103 = vld [vmem:[%s2 + $0x58] sm:$0xff]
    %v104 = vld [vmem:[%s2 + $0x60] sm:$0xff]
    %v105 = vld [vmem:[%s2 + $0x68] sm:$0xff]
    %v106 = vld [vmem:[%s2 + $0x70] sm:$0xff]
    %v107 = vld [vmem:[%s2 + $0x78] sm:$0xff]
    %v108 = vld [vmem:[%s2 + $0x80] sm:$0xff]
    %v109 = vld [vmem:[%s2 + $0x88] sm:$0xff]
    %v110 = vld [vmem:[%s2 + $0x90] sm:$0xff]
    %v111 = vld [vmem:[%s2 + $0x98] sm:$0xff]
    %v112 = vld [vmem:[%s2 + $0xa0] sm:$0xff]
    %v113 = vld [vmem:[%s2 + $0xa8] sm:$0xff]
    %v114 = vld [vmem:[%s2 + $0xb0] sm:$0xff]
    %v115 = vld [vmem:[%s2 + $0xb8] sm:$0xff]
    %v116 = vld [vmem:[%s2 + $0xc0] sm:$0xff]
    %v117 = vld [vmem:[%s2 + $0xc8] sm:$0xff]
    %v118 = vld [vmem:[%s2 + $0xd0] sm:$0xff]
    %v119 = vld [vmem:[%s2 + $0xd8] sm:$0xff]
    %v120 = vld [vmem:[%s2 + $0xe0] sm:$0xff]
    %v121 = vld [vmem:[%s2 + $0xe8] sm:$0xff]
    %v122 = vld [vmem:[%s2 + $0xf0] sm:$0xff]
    %v123 = vld [vmem:[%s2 + $0xf8] sm:$0xff]
    %v124 = vld [vmem:[%s3] sm:$0x3]
    %v125 = vld [vmem:[%s0] sm:$0xff]
    %v126 = vld [vmem:[%s0 + $0x8] sm:$0xff]
    %v127 = vlaneseq
    %v128 = vand.u32 %v127, 127
    %129 = vset.pattern.permute.xlu0 0
    %130 = vperm.xlu0 %129, %v60
    %v131 = vpop.permute.xlu0 %130
    %132 = vset.pattern.permute.xlu0 0
    %133 = vperm.xlu0 %132, %v61
    %v134 = vpop.permute.xlu0 %133
    %135 = vset.pattern.permute.xlu0 0
    %136 = vperm.xlu0 %135, %v62
    %v137 = vpop.permute.xlu0 %136
    %138 = vset.pattern.permute.xlu0 0
    %139 = vperm.xlu0 %138, %v63
    %v140 = vpop.permute.xlu0 %139
    %141 = vset.pattern.permute.xlu0 0
    %142 = vperm.xlu0 %141, %v64
    %v143 = vpop.permute.xlu0 %142
    %144 = vset.pattern.permute.xlu0 0
    %145 = vperm.xlu0 %144, %v65
    %v146 = vpop.permute.xlu0 %145
    %147 = vset.pattern.permute.xlu0 0
    %148 = vperm.xlu0 %147, %v66
    %v149 = vpop.permute.xlu0 %148
    %150 = vset.pattern.permute.xlu0 0
    %151 = vperm.xlu0 %150, %v67
    %v152 = vpop.permute.xlu0 %151
    %153 = vset.pattern.permute.xlu0 0
    %154 = vperm.xlu0 %153, %v68
    %v155 = vpop.permute.xlu0 %154
    %156 = vset.pattern.permute.xlu0 0
    %157 = vperm.xlu0 %156, %v69
    %v158 = vpop.permute.xlu0 %157
    %159 = vset.pattern.permute.xlu0 0
    %160 = vperm.xlu0 %159, %v70
    %v161 = vpop.permute.xlu0 %160
    %162 = vset.pattern.permute.xlu0 0
    %163 = vperm.xlu0 %162, %v71
    %v164 = vpop.permute.xlu0 %163
    %165 = vset.pattern.permute.xlu0 0
    %166 = vperm.xlu0 %165, %v72
    %v167 = vpop.permute.xlu0 %166
    %168 = vset.pattern.permute.xlu0 0
    %169 = vperm.xlu0 %168, %v73
    %v170 = vpop.permute.xlu0 %169
    %171 = vset.pattern.permute.xlu0 0
    %172 = vperm.xlu0 %171, %v74
    %v173 = vpop.permute.xlu0 %172
    %174 = vset.pattern.permute.xlu0 0
    %175 = vperm.xlu0 %174, %v75
    %v176 = vpop.permute.xlu0 %175
    %177 = vset.pattern.permute.xlu0 0
    %178 = vperm.xlu0 %177, %v76
    %v179 = vpop.permute.xlu0 %178
    %180 = vset.pattern.permute.xlu0 0
    %181 = vperm.xlu0 %180, %v77
    %v182 = vpop.permute.xlu0 %181
    %183 = vset.pattern.permute.xlu0 0
    %184 = vperm.xlu0 %183, %v78
    %v185 = vpop.permute.xlu0 %184
    %186 = vset.pattern.permute.xlu0 0
    %187 = vperm.xlu0 %186, %v79
    %v188 = vpop.permute.xlu0 %187
    %189 = vset.pattern.permute.xlu0 0
    %190 = vperm.xlu0 %189, %v80
    %v191 = vpop.permute.xlu0 %190
    %192 = vset.pattern.permute.xlu0 0
    %193 = vperm.xlu0 %192, %v81
    %v194 = vpop.permute.xlu0 %193
    %195 = vset.pattern.permute.xlu0 0
    %196 = vperm.xlu0 %195, %v82
    %v197 = vpop.permute.xlu0 %196
    %198 = vset.pattern.permute.xlu0 0
    %199 = vperm.xlu0 %198, %v83
    %v200 = vpop.permute.xlu0 %199
    %201 = vset.pattern.permute.xlu0 0
    %202 = vperm.xlu0 %201, %v84
    %v203 = vpop.permute.xlu0 %202
    %204 = vset.pattern.permute.xlu0 0
    %205 = vperm.xlu0 %204, %v85
    %v206 = vpop.permute.xlu0 %205
    %207 = vset.pattern.permute.xlu0 0
    %208 = vperm.xlu0 %207, %v86
    %v209 = vpop.permute.xlu0 %208
    %210 = vset.pattern.permute.xlu0 0
    %211 = vperm.xlu0 %210, %v87
    %v212 = vpop.permute.xlu0 %211
    %213 = vset.pattern.permute.xlu0 0
    %214 = vperm.xlu0 %213, %v88
    %v215 = vpop.permute.xlu0 %214
    %216 = vset.pattern.permute.xlu0 0
    %217 = vperm.xlu0 %216, %v89
    %v218 = vpop.permute.xlu0 %217
    %219 = vset.pattern.permute.xlu0 0
    %220 = vperm.xlu0 %219, %v90
    %v221 = vpop.permute.xlu0 %220
    %222 = vset.pattern.permute.xlu0 0
    %223 = vperm.xlu0 %222, %v91
    %v224 = vpop.permute.xlu0 %223
    %vm225 = vcmp.eq.s32.totalorder %v128, %v131
    %vm226 = vcmp.eq.s32.totalorder %v128, %v134
    %vm227 = vcmp.eq.s32.totalorder %v128, %v137
    %vm228 = vcmp.eq.s32.totalorder %v128, %v140
    %vm229 = vcmp.eq.s32.totalorder %v128, %v143
    %vm230 = vcmp.eq.s32.totalorder %v128, %v146
    %vm231 = vcmp.eq.s32.totalorder %v128, %v149
    %vm232 = vcmp.eq.s32.totalorder %v128, %v152
    %vm233 = vcmp.eq.s32.totalorder %v128, %v155
    %vm234 = vcmp.eq.s32.totalorder %v128, %v158
    %vm235 = vcmp.eq.s32.totalorder %v128, %v161
    %vm236 = vcmp.eq.s32.totalorder %v128, %v164
    %vm237 = vcmp.eq.s32.totalorder %v128, %v167
    %vm238 = vcmp.eq.s32.totalorder %v128, %v170
    %vm239 = vcmp.eq.s32.totalorder %v128, %v173
    %vm240 = vcmp.eq.s32.totalorder %v128, %v176
    %vm241 = vcmp.eq.s32.totalorder %v128, %v179
    %vm242 = vcmp.eq.s32.totalorder %v128, %v182
    %vm243 = vcmp.eq.s32.totalorder %v128, %v185
    %vm244 = vcmp.eq.s32.totalorder %v128, %v188
    %vm245 = vcmp.eq.s32.totalorder %v128, %v191
    %vm246 = vcmp.eq.s32.totalorder %v128, %v194
    %vm247 = vcmp.eq.s32.totalorder %v128, %v197
    %vm248 = vcmp.eq.s32.totalorder %v128, %v200
    %vm249 = vcmp.eq.s32.totalorder %v128, %v203
    %vm250 = vcmp.eq.s32.totalorder %v128, %v206
    %vm251 = vcmp.eq.s32.totalorder %v128, %v209
    %vm252 = vcmp.eq.s32.totalorder %v128, %v212
    %vm253 = vcmp.eq.s32.totalorder %v128, %v215
    %vm254 = vcmp.eq.s32.totalorder %v128, %v218
    %vm255 = vcmp.eq.s32.totalorder %v128, %v221
    %vm256 = vcmp.eq.s32.totalorder %v128, %v224
    %v257 = vsel %vm225, 1, 0
    %v258 = vsel %vm226, 1, 0
    %v259 = vsel %vm227, 1, 0
    %v260 = vsel %vm228, 1, 0
    %v261 = vsel %vm229, 1, 0
    %v262 = vsel %vm230, 1, 0
    %v263 = vsel %vm231, 1, 0
    %v264 = vsel %vm232, 1, 0
    %v265 = vsel %vm233, 1, 0
    %v266 = vsel %vm234, 1, 0
    %v267 = vsel %vm235, 1, 0
    %v268 = vsel %vm236, 1, 0
    %v269 = vsel %vm237, 1, 0
    %v270 = vsel %vm238, 1, 0
    %v271 = vsel %vm239, 1, 0
    %v272 = vsel %vm240, 1, 0
    %v273 = vsel %vm241, 1, 0
    %v274 = vsel %vm242, 1, 0
    %v275 = vsel %vm243, 1, 0
    %v276 = vsel %vm244, 1, 0
    %v277 = vsel %vm245, 1, 0
    %v278 = vsel %vm246, 1, 0
    %v279 = vsel %vm247, 1, 0
    %v280 = vsel %vm248, 1, 0
    %v281 = vsel %vm249, 1, 0
    %v282 = vsel %vm250, 1, 0
    %v283 = vsel %vm251, 1, 0
    %v284 = vsel %vm252, 1, 0
    %v285 = vsel %vm253, 1, 0
    %v286 = vsel %vm254, 1, 0
    %v287 = vsel %vm255, 1, 0
    %v288 = vsel %vm256, 1, 0
    %v289 = vcvt.s32.f32 %v257
    %v290 = vcvt.s32.f32 %v258
    %v291 = vcvt.s32.f32 %v259
    %v292 = vcvt.s32.f32 %v260
    %v293 = vcvt.s32.f32 %v261
    %v294 = vcvt.s32.f32 %v262
    %v295 = vcvt.s32.f32 %v263
    %v296 = vcvt.s32.f32 %v264
    %v297 = vcvt.s32.f32 %v265
    %v298 = vcvt.s32.f32 %v266
    %v299 = vcvt.s32.f32 %v267
    %v300 = vcvt.s32.f32 %v268
    %v301 = vcvt.s32.f32 %v269
    %v302 = vcvt.s32.f32 %v270
    %v303 = vcvt.s32.f32 %v271
    %v304 = vcvt.s32.f32 %v272
    %v305 = vcvt.s32.f32 %v273
    %v306 = vcvt.s32.f32 %v274
    %v307 = vcvt.s32.f32 %v275
    %v308 = vcvt.s32.f32 %v276
    %v309 = vcvt.s32.f32 %v277
    %v310 = vcvt.s32.f32 %v278
    %v311 = vcvt.s32.f32 %v279
    %v312 = vcvt.s32.f32 %v280
    %v313 = vcvt.s32.f32 %v281
    %v314 = vcvt.s32.f32 %v282
    %v315 = vcvt.s32.f32 %v283
    %v316 = vcvt.s32.f32 %v284
    %v317 = vcvt.s32.f32 %v285
    %v318 = vcvt.s32.f32 %v286
    %v319 = vcvt.s32.f32 %v287
    %v320 = vcvt.s32.f32 %v288
    %321 = vset.pattern.permute.xlu0 0
    %322 = vperm.xlu0 %321, %v92
    %v323 = vpop.permute.xlu0 %322
    %324 = vset.pattern.permute.xlu0 0
    %325 = vperm.xlu0 %324, %v93
    %v326 = vpop.permute.xlu0 %325
    %327 = vset.pattern.permute.xlu0 0
    %328 = vperm.xlu0 %327, %v94
    %v329 = vpop.permute.xlu0 %328
    %330 = vset.pattern.permute.xlu0 0
    %331 = vperm.xlu0 %330, %v95
    %v332 = vpop.permute.xlu0 %331
    %333 = vset.pattern.permute.xlu0 0
    %334 = vperm.xlu0 %333, %v96
    %v335 = vpop.permute.xlu0 %334
    %336 = vset.pattern.permute.xlu0 0
    %337 = vperm.xlu0 %336, %v97
    %v338 = vpop.permute.xlu0 %337
    %339 = vset.pattern.permute.xlu0 0
    %340 = vperm.xlu0 %339, %v98
    %v341 = vpop.permute.xlu0 %340
    %342 = vset.pattern.permute.xlu0 0
    %343 = vperm.xlu0 %342, %v99
    %v344 = vpop.permute.xlu0 %343
    %345 = vset.pattern.permute.xlu0 0
    %346 = vperm.xlu0 %345, %v100
    %v347 = vpop.permute.xlu0 %346
    %348 = vset.pattern.permute.xlu0 0
    %349 = vperm.xlu0 %348, %v101
    %v350 = vpop.permute.xlu0 %349
    %351 = vset.pattern.permute.xlu0 0
    %352 = vperm.xlu0 %351, %v102
    %v353 = vpop.permute.xlu0 %352
    %354 = vset.pattern.permute.xlu0 0
    %355 = vperm.xlu0 %354, %v103
    %v356 = vpop.permute.xlu0 %355
    %357 = vset.pattern.permute.xlu0 0
    %358 = vperm.xlu0 %357, %v104
    %v359 = vpop.permute.xlu0 %358
    %360 = vset.pattern.permute.xlu0 0
    %361 = vperm.xlu0 %360, %v105
    %v362 = vpop.permute.xlu0 %361
    %363 = vset.pattern.permute.xlu0 0
    %364 = vperm.xlu0 %363, %v106
    %v365 = vpop.permute.xlu0 %364
    %366 = vset.pattern.permute.xlu0 0
    %367 = vperm.xlu0 %366, %v107
    %v368 = vpop.permute.xlu0 %367
    %369 = vset.pattern.permute.xlu0 0
    %370 = vperm.xlu0 %369, %v108
    %v371 = vpop.permute.xlu0 %370
    %372 = vset.pattern.permute.xlu0 0
    %373 = vperm.xlu0 %372, %v109
    %v374 = vpop.permute.xlu0 %373
    %375 = vset.pattern.permute.xlu0 0
    %376 = vperm.xlu0 %375, %v110
    %v377 = vpop.permute.xlu0 %376
    %378 = vset.pattern.permute.xlu0 0
    %379 = vperm.xlu0 %378, %v111
    %v380 = vpop.permute.xlu0 %379
    %381 = vset.pattern.permute.xlu0 0
    %382 = vperm.xlu0 %381, %v112
    %v383 = vpop.permute.xlu0 %382
    %384 = vset.pattern.permute.xlu0 0
    %385 = vperm.xlu0 %384, %v113
    %v386 = vpop.permute.xlu0 %385
    %387 = vset.pattern.permute.xlu0 0
    %388 = vperm.xlu0 %387, %v114
    %v389 = vpop.permute.xlu0 %388
    %390 = vset.pattern.permute.xlu0 0
    %391 = vperm.xlu0 %390, %v115
    %v392 = vpop.permute.xlu0 %391
    %393 = vset.pattern.permute.xlu0 0
    %394 = vperm.xlu0 %393, %v116
    %v395 = vpop.permute.xlu0 %394
    %396 = vset.pattern.permute.xlu0 0
    %397 = vperm.xlu0 %396, %v117
    %v398 = vpop.permute.xlu0 %397
    %399 = vset.pattern.permute.xlu0 0
    %400 = vperm.xlu0 %399, %v118
    %v401 = vpop.permute.xlu0 %400
    %402 = vset.pattern.permute.xlu0 0
    %403 = vperm.xlu0 %402, %v119
    %v404 = vpop.permute.xlu0 %403
    %405 = vset.pattern.permute.xlu0 0
    %406 = vperm.xlu0 %405, %v120
    %v407 = vpop.permute.xlu0 %406
    %408 = vset.pattern.permute.xlu0 0
    %409 = vperm.xlu0 %408, %v121
    %v410 = vpop.permute.xlu0 %409
    %411 = vset.pattern.permute.xlu0 0
    %412 = vperm.xlu0 %411, %v122
    %v413 = vpop.permute.xlu0 %412
    %414 = vset.pattern.permute.xlu0 0
    %415 = vperm.xlu0 %414, %v123
    %v416 = vpop.permute.xlu0 %415
    %vm417 = vcmp.eq.s32.totalorder %v128, %v323
    %vm418 = vcmp.eq.s32.totalorder %v128, %v326
    %vm419 = vcmp.eq.s32.totalorder %v128, %v329
    %vm420 = vcmp.eq.s32.totalorder %v128, %v332
    %vm421 = vcmp.eq.s32.totalorder %v128, %v335
    %vm422 = vcmp.eq.s32.totalorder %v128, %v338
    %vm423 = vcmp.eq.s32.totalorder %v128, %v341
    %vm424 = vcmp.eq.s32.totalorder %v128, %v344
    %vm425 = vcmp.eq.s32.totalorder %v128, %v347
    %vm426 = vcmp.eq.s32.totalorder %v128, %v350
    %vm427 = vcmp.eq.s32.totalorder %v128, %v353
    %vm428 = vcmp.eq.s32.totalorder %v128, %v356
    %vm429 = vcmp.eq.s32.totalorder %v128, %v359
    %vm430 = vcmp.eq.s32.totalorder %v128, %v362
    %vm431 = vcmp.eq.s32.totalorder %v128, %v365
    %vm432 = vcmp.eq.s32.totalorder %v128, %v368
    %vm433 = vcmp.eq.s32.totalorder %v128, %v371
    %vm434 = vcmp.eq.s32.totalorder %v128, %v374
    %vm435 = vcmp.eq.s32.totalorder %v128, %v377
    %vm436 = vcmp.eq.s32.totalorder %v128, %v380
    %vm437 = vcmp.eq.s32.totalorder %v128, %v383
    %vm438 = vcmp.eq.s32.totalorder %v128, %v386
    %vm439 = vcmp.eq.s32.totalorder %v128, %v389
    %vm440 = vcmp.eq.s32.totalorder %v128, %v392
    %vm441 = vcmp.eq.s32.totalorder %v128, %v395
    %vm442 = vcmp.eq.s32.totalorder %v128, %v398
    %vm443 = vcmp.eq.s32.totalorder %v128, %v401
    %vm444 = vcmp.eq.s32.totalorder %v128, %v404
    %vm445 = vcmp.eq.s32.totalorder %v128, %v407
    %vm446 = vcmp.eq.s32.totalorder %v128, %v410
    %vm447 = vcmp.eq.s32.totalorder %v128, %v413
    %vm448 = vcmp.eq.s32.totalorder %v128, %v416
    %v449 = vsel %vm417, 1, 0
    %v450 = vsel %vm418, 1, 0
    %v451 = vsel %vm419, 1, 0
    %v452 = vsel %vm420, 1, 0
    %v453 = vsel %vm421, 1, 0
    %v454 = vsel %vm422, 1, 0
    %v455 = vsel %vm423, 1, 0
    %v456 = vsel %vm424, 1, 0
    %v457 = vsel %vm425, 1, 0
    %v458 = vsel %vm426, 1, 0
    %v459 = vsel %vm427, 1, 0
    %v460 = vsel %vm428, 1, 0
    %v461 = vsel %vm429, 1, 0
    %v462 = vsel %vm430, 1, 0
    %v463 = vsel %vm431, 1, 0
    %v464 = vsel %vm432, 1, 0
    %v465 = vsel %vm433, 1, 0
    %v466 = vsel %vm434, 1, 0
    %v467 = vsel %vm435, 1, 0
    %v468 = vsel %vm436, 1, 0
    %v469 = vsel %vm437, 1, 0
    %v470 = vsel %vm438, 1, 0
    %v471 = vsel %vm439, 1, 0
    %v472 = vsel %vm440, 1, 0
    %v473 = vsel %vm441, 1, 0
    %v474 = vsel %vm442, 1, 0
    %v475 = vsel %vm443, 1, 0
    %v476 = vsel %vm444, 1, 0
    %v477 = vsel %vm445, 1, 0
    %v478 = vsel %vm446, 1, 0
    %v479 = vsel %vm447, 1, 0
    %v480 = vsel %vm448, 1, 0
    %v481 = vcvt.s32.f32 %v449
    %v482 = vcvt.s32.f32 %v450
    %v483 = vcvt.s32.f32 %v451
    %v484 = vcvt.s32.f32 %v452
    %v485 = vcvt.s32.f32 %v453
    %v486 = vcvt.s32.f32 %v454
    %v487 = vcvt.s32.f32 %v455
    %v488 = vcvt.s32.f32 %v456
    %v489 = vcvt.s32.f32 %v457
    %v490 = vcvt.s32.f32 %v458
    %v491 = vcvt.s32.f32 %v459
    %v492 = vcvt.s32.f32 %v460
    %v493 = vcvt.s32.f32 %v461
    %v494 = vcvt.s32.f32 %v462
    %v495 = vcvt.s32.f32 %v463
    %v496 = vcvt.s32.f32 %v464
    %v497 = vcvt.s32.f32 %v465
    %v498 = vcvt.s32.f32 %v466
    %v499 = vcvt.s32.f32 %v467
    %v500 = vcvt.s32.f32 %v468
    %v501 = vcvt.s32.f32 %v469
    %v502 = vcvt.s32.f32 %v470
    %v503 = vcvt.s32.f32 %v471
    %v504 = vcvt.s32.f32 %v472
    %v505 = vcvt.s32.f32 %v473
    %v506 = vcvt.s32.f32 %v474
    %v507 = vcvt.s32.f32 %v475
    %v508 = vcvt.s32.f32 %v476
    %v509 = vcvt.s32.f32 %v477
    %v510 = vcvt.s32.f32 %v478
    %v511 = vcvt.s32.f32 %v479
    %v512 = vcvt.s32.f32 %v480
    %vm513 = vcmask 130048
    %v515 = vsel %vm513, %v289, 0
    %v518 = vsel %vm513, %v290, 0
    %v521 = vsel %vm513, %v291, 0
    %v524 = vsel %vm513, %v292, 0
    %v527 = vsel %vm513, %v293, 0
    %v530 = vsel %vm513, %v294, 0
    %v533 = vsel %vm513, %v295, 0
    %v536 = vsel %vm513, %v296, 0
    %v539 = vsel %vm513, %v297, 0
    %v542 = vsel %vm513, %v298, 0
    %v545 = vsel %vm513, %v299, 0
    %v548 = vsel %vm513, %v300, 0
    %v551 = vsel %vm513, %v301, 0
    %v554 = vsel %vm513, %v302, 0
    %v557 = vsel %vm513, %v303, 0
    %v560 = vsel %vm513, %v304, 0
    %v563 = vsel %vm513, %v305, 0
    %v566 = vsel %vm513, %v306, 0
    %v569 = vsel %vm513, %v307, 0
    %v572 = vsel %vm513, %v308, 0
    %v575 = vsel %vm513, %v309, 0
    %v578 = vsel %vm513, %v310, 0
    %v581 = vsel %vm513, %v311, 0
    %v584 = vsel %vm513, %v312, 0
    %v587 = vsel %vm513, %v313, 0
    %v590 = vsel %vm513, %v314, 0
    %v593 = vsel %vm513, %v315, 0
    %v596 = vsel %vm513, %v316, 0
    %v599 = vsel %vm513, %v317, 0
    %v602 = vsel %vm513, %v318, 0
    %v605 = vsel %vm513, %v319, 0
    %v608 = vsel %vm513, %v320, 0
    %610 = vmatpush.msra.mxu0 0.0
    %611 = vmatpush.msra.mxu0 0.0
    %612 = vmatpush.msra.mxu0 0.0
    %613 = vmatpush.msra.mxu0 0.0
    %614 = vmatpush.msra.mxu0 0.0
    %615 = vmatpush.msra.mxu0 0.0
    %616 = vmatpush.msra.mxu0 0.0
    %617 = vmatpush.msra.mxu0 0.0
    %618 = vmatpush.msra.mxu0 0.0
    %619 = vmatpush.msra.mxu0 0.0
    %620 = vmatpush.msra.mxu0 0.0
    %621 = vmatpush.msra.mxu0 0.0
    %622 = vmatpush.msra.mxu0 0.0
    %623 = vmatpush.msra.mxu0 0.0
    %624 = vmatpush.msra.mxu0 %v126
    %625 = vmatpush.msra.mxu0 %v125
    %626 = vmatmul.f32.gmra.mxu0 %v515
    %v627 = vpop.f32.mrf.mxu0
    %v628 = vadd.f32 0.0, %v627
    %629 = vmatmul.f32.gmra.mxu0 %v518
    %v630 = vpop.f32.mrf.mxu0
    %v631 = vadd.f32 0.0, %v630
    %632 = vmatmul.f32.gmra.mxu0 %v521
    %v633 = vpop.f32.mrf.mxu0
    %v634 = vadd.f32 0.0, %v633
    %635 = vmatmul.f32.gmra.mxu0 %v524
    %v636 = vpop.f32.mrf.mxu0
    %v637 = vadd.f32 0.0, %v636
    %638 = vmatmul.f32.gmra.mxu0 %v527
    %v639 = vpop.f32.mrf.mxu0
    %v640 = vadd.f32 0.0, %v639
    %641 = vmatmul.f32.gmra.mxu0 %v530
    %v642 = vpop.f32.mrf.mxu0
    %v643 = vadd.f32 0.0, %v642
    %644 = vmatmul.f32.gmra.mxu0 %v533
    %v645 = vpop.f32.mrf.mxu0
    %v646 = vadd.f32 0.0, %v645
    %647 = vmatmul.f32.gmra.mxu0 %v536
    %v648 = vpop.f32.mrf.mxu0
    %v649 = vadd.f32 0.0, %v648
    %650 = vmatmul.f32.gmra.mxu0 %v539
    %v651 = vpop.f32.mrf.mxu0
    %v652 = vadd.f32 0.0, %v651
    %653 = vmatmul.f32.gmra.mxu0 %v542
    %v654 = vpop.f32.mrf.mxu0
    %v655 = vadd.f32 0.0, %v654
    %656 = vmatmul.f32.gmra.mxu0 %v545
    %v657 = vpop.f32.mrf.mxu0
    %v658 = vadd.f32 0.0, %v657
    %659 = vmatmul.f32.gmra.mxu0 %v548
    %v660 = vpop.f32.mrf.mxu0
    %v661 = vadd.f32 0.0, %v660
    %662 = vmatmul.f32.gmra.mxu0 %v551
    %v663 = vpop.f32.mrf.mxu0
    %v664 = vadd.f32 0.0, %v663
    %665 = vmatmul.f32.gmra.mxu0 %v554
    %v666 = vpop.f32.mrf.mxu0
    %v667 = vadd.f32 0.0, %v666
    %668 = vmatmul.f32.gmra.mxu0 %v557
    %v669 = vpop.f32.mrf.mxu0
    %v670 = vadd.f32 0.0, %v669
    %671 = vmatmul.f32.gmra.mxu0 %v560
    %v672 = vpop.f32.mrf.mxu0
    %v673 = vadd.f32 0.0, %v672
    %674 = vmatmul.f32.gmra.mxu0 %v563
    %v675 = vpop.f32.mrf.mxu0
    %v676 = vadd.f32 0.0, %v675
    %677 = vmatmul.f32.gmra.mxu0 %v566
    %v678 = vpop.f32.mrf.mxu0
    %v679 = vadd.f32 0.0, %v678
    %680 = vmatmul.f32.gmra.mxu0 %v569
    %v681 = vpop.f32.mrf.mxu0
    %v682 = vadd.f32 0.0, %v681
    %683 = vmatmul.f32.gmra.mxu0 %v572
    %v684 = vpop.f32.mrf.mxu0
    %v685 = vadd.f32 0.0, %v684
    %686 = vmatmul.f32.gmra.mxu0 %v575
    %v687 = vpop.f32.mrf.mxu0
    %v688 = vadd.f32 0.0, %v687
    %689 = vmatmul.f32.gmra.mxu0 %v578
    %v690 = vpop.f32.mrf.mxu0
    %v691 = vadd.f32 0.0, %v690
    %692 = vmatmul.f32.gmra.mxu0 %v581
    %v693 = vpop.f32.mrf.mxu0
    %v694 = vadd.f32 0.0, %v693
    %695 = vmatmul.f32.gmra.mxu0 %v584
    %v696 = vpop.f32.mrf.mxu0
    %v697 = vadd.f32 0.0, %v696
    %698 = vmatmul.f32.gmra.mxu0 %v587
    %v699 = vpop.f32.mrf.mxu0
    %v700 = vadd.f32 0.0, %v699
    %701 = vmatmul.f32.gmra.mxu0 %v590
    %v702 = vpop.f32.mrf.mxu0
    %v703 = vadd.f32 0.0, %v702
    %704 = vmatmul.f32.gmra.mxu0 %v593
    %v705 = vpop.f32.mrf.mxu0
    %v706 = vadd.f32 0.0, %v705
    %707 = vmatmul.f32.gmra.mxu0 %v596
    %v708 = vpop.f32.mrf.mxu0
    %v709 = vadd.f32 0.0, %v708
    %710 = vmatmul.f32.gmra.mxu0 %v599
    %v711 = vpop.f32.mrf.mxu0
    %v712 = vadd.f32 0.0, %v711
    %713 = vmatmul.f32.gmra.mxu0 %v602
    %v714 = vpop.f32.mrf.mxu0
    %v715 = vadd.f32 0.0, %v714
    %716 = vmatmul.f32.gmra.mxu0 %v605
    %v717 = vpop.f32.mrf.mxu0
    %v718 = vadd.f32 0.0, %v717
    %719 = vmatmul.f32.gmra.mxu0 %v608
    %v720 = vpop.f32.mrf.mxu0
    %v721 = vadd.f32 0.0, %v720
    %722 = vdwg.mxu0
    %v724 = vsel %vm513, %v481, 0
    %v727 = vsel %vm513, %v482, 0
    %v730 = vsel %vm513, %v483, 0
    %v733 = vsel %vm513, %v484, 0
    %v736 = vsel %vm513, %v485, 0
    %v739 = vsel %vm513, %v486, 0
    %v742 = vsel %vm513, %v487, 0
    %v745 = vsel %vm513, %v488, 0
    %v748 = vsel %vm513, %v489, 0
    %v751 = vsel %vm513, %v490, 0
    %v754 = vsel %vm513, %v491, 0
    %v757 = vsel %vm513, %v492, 0
    %v760 = vsel %vm513, %v493, 0
    %v763 = vsel %vm513, %v494, 0
    %v766 = vsel %vm513, %v495, 0
    %v769 = vsel %vm513, %v496, 0
    %v772 = vsel %vm513, %v497, 0
    %v775 = vsel %vm513, %v498, 0
    %v778 = vsel %vm513, %v499, 0
    %v781 = vsel %vm513, %v500, 0
    %v784 = vsel %vm513, %v501, 0
    %v787 = vsel %vm513, %v502, 0
    %v790 = vsel %vm513, %v503, 0
    %v793 = vsel %vm513, %v504, 0
    %v796 = vsel %vm513, %v505, 0
    %v799 = vsel %vm513, %v506, 0
    %v802 = vsel %vm513, %v507, 0
    %v805 = vsel %vm513, %v508, 0
    %v808 = vsel %vm513, %v509, 0
    %v811 = vsel %vm513, %v510, 0
    %v814 = vsel %vm513, %v511, 0
    %v817 = vsel %vm513, %v512, 0
    %819 = vmatpush.msra.mxu0 0.0
    %820 = vmatpush.msra.mxu0 0.0
    %821 = vmatpush.msra.mxu0 0.0
    %822 = vmatpush.msra.mxu0 0.0
    %823 = vmatpush.msra.mxu0 0.0
    %824 = vmatpush.msra.mxu0 0.0
    %825 = vmatpush.msra.mxu0 0.0
    %826 = vmatpush.msra.mxu0 0.0
    %827 = vmatpush.msra.mxu0 0.0
    %828 = vmatpush.msra.mxu0 0.0
    %829 = vmatpush.msra.mxu0 0.0
    %830 = vmatpush.msra.mxu0 0.0
    %831 = vmatpush.msra.mxu0 0.0
    %832 = vmatpush.msra.mxu0 0.0
    %833 = vmatpush.msra.mxu0 %v126
    %834 = vmatpush.msra.mxu0 %v125
    %835 = vmatmul.f32.gmra.mxu0 %v724
    %v836 = vpop.f32.mrf.mxu0
    %v837 = vadd.f32 0.0, %v836
    %838 = vmatmul.f32.gmra.mxu0 %v727
    %v839 = vpop.f32.mrf.mxu0
    %v840 = vadd.f32 0.0, %v839
    %841 = vmatmul.f32.gmra.mxu0 %v730
    %v842 = vpop.f32.mrf.mxu0
    %v843 = vadd.f32 0.0, %v842
    %844 = vmatmul.f32.gmra.mxu0 %v733
    %v845 = vpop.f32.mrf.mxu0
    %v846 = vadd.f32 0.0, %v845
    %847 = vmatmul.f32.gmra.mxu0 %v736
    %v848 = vpop.f32.mrf.mxu0
    %v849 = vadd.f32 0.0, %v848
    %850 = vmatmul.f32.gmra.mxu0 %v739
    %v851 = vpop.f32.mrf.mxu0
    %v852 = vadd.f32 0.0, %v851
    %853 = vmatmul.f32.gmra.mxu0 %v742
    %v854 = vpop.f32.mrf.mxu0
    %v855 = vadd.f32 0.0, %v854
    %856 = vmatmul.f32.gmra.mxu0 %v745
    %v857 = vpop.f32.mrf.mxu0
    %v858 = vadd.f32 0.0, %v857
    %859 = vmatmul.f32.gmra.mxu0 %v748
    %v860 = vpop.f32.mrf.mxu0
    %v861 = vadd.f32 0.0, %v860
    %862 = vmatmul.f32.gmra.mxu0 %v751
    %v863 = vpop.f32.mrf.mxu0
    %v864 = vadd.f32 0.0, %v863
    %865 = vmatmul.f32.gmra.mxu0 %v754
    %v866 = vpop.f32.mrf.mxu0
    %v867 = vadd.f32 0.0, %v866
    %868 = vmatmul.f32.gmra.mxu0 %v757
    %v869 = vpop.f32.mrf.mxu0
    %v870 = vadd.f32 0.0, %v869
    %871 = vmatmul.f32.gmra.mxu0 %v760
    %v872 = vpop.f32.mrf.mxu0
    %v873 = vadd.f32 0.0, %v872
    %874 = vmatmul.f32.gmra.mxu0 %v763
    %v875 = vpop.f32.mrf.mxu0
    %v876 = vadd.f32 0.0, %v875
    %877 = vmatmul.f32.gmra.mxu0 %v766
    %v878 = vpop.f32.mrf.mxu0
    %v879 = vadd.f32 0.0, %v878
    %880 = vmatmul.f32.gmra.mxu0 %v769
    %v881 = vpop.f32.mrf.mxu0
    %v882 = vadd.f32 0.0, %v881
    %883 = vmatmul.f32.gmra.mxu0 %v772
    %v884 = vpop.f32.mrf.mxu0
    %v885 = vadd.f32 0.0, %v884
    %886 = vmatmul.f32.gmra.mxu0 %v775
    %v887 = vpop.f32.mrf.mxu0
    %v888 = vadd.f32 0.0, %v887
    %889 = vmatmul.f32.gmra.mxu0 %v778
    %v890 = vpop.f32.mrf.mxu0
    %v891 = vadd.f32 0.0, %v890
    %892 = vmatmul.f32.gmra.mxu0 %v781
    %v893 = vpop.f32.mrf.mxu0
    %v894 = vadd.f32 0.0, %v893
    %895 = vmatmul.f32.gmra.mxu0 %v784
    %v896 = vpop.f32.mrf.mxu0
    %v897 = vadd.f32 0.0, %v896
    %898 = vmatmul.f32.gmra.mxu0 %v787
    %v899 = vpop.f32.mrf.mxu0
    %v900 = vadd.f32 0.0, %v899
    %901 = vmatmul.f32.gmra.mxu0 %v790
    %v902 = vpop.f32.mrf.mxu0
    %v903 = vadd.f32 0.0, %v902
    %904 = vmatmul.f32.gmra.mxu0 %v793
    %v905 = vpop.f32.mrf.mxu0
    %v906 = vadd.f32 0.0, %v905
    %907 = vmatmul.f32.gmra.mxu0 %v796
    %v908 = vpop.f32.mrf.mxu0
    %v909 = vadd.f32 0.0, %v908
    %910 = vmatmul.f32.gmra.mxu0 %v799
    %v911 = vpop.f32.mrf.mxu0
    %v912 = vadd.f32 0.0, %v911
    %913 = vmatmul.f32.gmra.mxu0 %v802
    %v914 = vpop.f32.mrf.mxu0
    %v915 = vadd.f32 0.0, %v914
    %916 = vmatmul.f32.gmra.mxu0 %v805
    %v917 = vpop.f32.mrf.mxu0
    %v918 = vadd.f32 0.0, %v917
    %919 = vmatmul.f32.gmra.mxu0 %v808
    %v920 = vpop.f32.mrf.mxu0
    %v921 = vadd.f32 0.0, %v920
    %922 = vmatmul.f32.gmra.mxu0 %v811
    %v923 = vpop.f32.mrf.mxu0
    %v924 = vadd.f32 0.0, %v923
    %925 = vmatmul.f32.gmra.mxu0 %v814
    %v926 = vpop.f32.mrf.mxu0
    %v927 = vadd.f32 0.0, %v926
    %928 = vmatmul.f32.gmra.mxu0 %v817
    %v929 = vpop.f32.mrf.mxu0
    %v930 = vadd.f32 0.0, %v929
    %931 = vdwg.mxu0
    %v932 = vld [vmem:[%s4] sm:$0xff]
    %v933 = vld [vmem:[%s4 + $0x8] sm:$0xff]
    %v934 = vld [vmem:[%s4 + $0x10] sm:$0xff]
    %v935 = vld [vmem:[%s4 + $0x18] sm:$0xff]
    %v936 = vld [vmem:[%s4 + $0x20] sm:$0xff]
    %v937 = vld [vmem:[%s4 + $0x28] sm:$0xff]
    %v938 = vld [vmem:[%s4 + $0x30] sm:$0xff]
    %v939 = vld [vmem:[%s4 + $0x38] sm:$0xff]
    %v940 = vld [vmem:[%s4 + $0x40] sm:$0xff]
    %v941 = vld [vmem:[%s4 + $0x48] sm:$0xff]
    %v942 = vld [vmem:[%s4 + $0x50] sm:$0xff]
    %v943 = vld [vmem:[%s4 + $0x58] sm:$0xff]
    %v944 = vld [vmem:[%s4 + $0x60] sm:$0xff]
    %v945 = vld [vmem:[%s4 + $0x68] sm:$0xff]
    %v946 = vld [vmem:[%s4 + $0x70] sm:$0xff]
    %v947 = vld [vmem:[%s4 + $0x78] sm:$0xff]
    %v948 = vld [vmem:[%s5] sm:$0xff]
    %v949 = vld [vmem:[%s5 + $0x8] sm:$0xff]
    %v950 = vld [vmem:[%s5 + $0x10] sm:$0xff]
    %v951 = vld [vmem:[%s5 + $0x18] sm:$0xff]
    %v952 = vld [vmem:[%s5 + $0x20] sm:$0xff]
    %v953 = vld [vmem:[%s5 + $0x28] sm:$0xff]
    %v954 = vld [vmem:[%s5 + $0x30] sm:$0xff]
    %v955 = vld [vmem:[%s5 + $0x38] sm:$0xff]
    %v956 = vld [vmem:[%s5 + $0x40] sm:$0xff]
    %v957 = vld [vmem:[%s5 + $0x48] sm:$0xff]
    %v958 = vld [vmem:[%s5 + $0x50] sm:$0xff]
    %v959 = vld [vmem:[%s5 + $0x58] sm:$0xff]
    %v960 = vld [vmem:[%s5 + $0x60] sm:$0xff]
    %v961 = vld [vmem:[%s5 + $0x68] sm:$0xff]
    %v962 = vld [vmem:[%s5 + $0x70] sm:$0xff]
    %v963 = vld [vmem:[%s5 + $0x78] sm:$0xff]
    %964 = vmatpush.msra.mxu0 %v963
    %965 = vmatpush.msra.mxu0 %v962
    %966 = vmatpush.msra.mxu0 %v961
    %967 = vmatpush.msra.mxu0 %v960
    %968 = vmatpush.msra.mxu0 %v959
    %969 = vmatpush.msra.mxu0 %v958
    %970 = vmatpush.msra.mxu0 %v957
    %971 = vmatpush.msra.mxu0 %v956
    %972 = vmatpush.msra.mxu0 %v955
    %973 = vmatpush.msra.mxu0 %v954
    %974 = vmatpush.msra.mxu0 %v953
    %975 = vmatpush.msra.mxu0 %v952
    %976 = vmatpush.msra.mxu0 %v951
    %977 = vmatpush.msra.mxu0 %v950
    %978 = vmatpush.msra.mxu0 %v949
    %979 = vmatpush.msra.mxu0 %v948
    %980 = vmatmul.f32.gmra.mxu0 %v837
    %v981 = vpop.f32.mrf.mxu0
    %v982 = vadd.f32 0.0, %v981
    %983 = vmatmul.f32.gmra.mxu0 %v840
    %v984 = vpop.f32.mrf.mxu0
    %v985 = vadd.f32 0.0, %v984
    %986 = vmatmul.f32.gmra.mxu0 %v843
    %v987 = vpop.f32.mrf.mxu0
    %v988 = vadd.f32 0.0, %v987
    %989 = vmatmul.f32.gmra.mxu0 %v846
    %v990 = vpop.f32.mrf.mxu0
    %v991 = vadd.f32 0.0, %v990
    %992 = vmatmul.f32.gmra.mxu0 %v849
    %v993 = vpop.f32.mrf.mxu0
    %v994 = vadd.f32 0.0, %v993
    %995 = vmatmul.f32.gmra.mxu0 %v852
    %v996 = vpop.f32.mrf.mxu0
    %v997 = vadd.f32 0.0, %v996
    %998 = vmatmul.f32.gmra.mxu0 %v855
    %v999 = vpop.f32.mrf.mxu0
    %v1000 = vadd.f32 0.0, %v999
    %1001 = vmatmul.f32.gmra.mxu0 %v858
    %v1002 = vpop.f32.mrf.mxu0
    %v1003 = vadd.f32 0.0, %v1002
    %1004 = vmatmul.f32.gmra.mxu0 %v861
    %v1005 = vpop.f32.mrf.mxu0
    %v1006 = vadd.f32 0.0, %v1005
    %1007 = vmatmul.f32.gmra.mxu0 %v864
    %v1008 = vpop.f32.mrf.mxu0
    %v1009 = vadd.f32 0.0, %v1008
    %1010 = vmatmul.f32.gmra.mxu0 %v867
    %v1011 = vpop.f32.mrf.mxu0
    %v1012 = vadd.f32 0.0, %v1011
    %1013 = vmatmul.f32.gmra.mxu0 %v870
    %v1014 = vpop.f32.mrf.mxu0
    %v1015 = vadd.f32 0.0, %v1014
    %1016 = vmatmul.f32.gmra.mxu0 %v873
    %v1017 = vpop.f32.mrf.mxu0
    %v1018 = vadd.f32 0.0, %v1017
    %1019 = vmatmul.f32.gmra.mxu0 %v876
    %v1020 = vpop.f32.mrf.mxu0
    %v1021 = vadd.f32 0.0, %v1020
    %1022 = vmatmul.f32.gmra.mxu0 %v879
    %v1023 = vpop.f32.mrf.mxu0
    %v1024 = vadd.f32 0.0, %v1023
    %1025 = vmatmul.f32.gmra.mxu0 %v882
    %v1026 = vpop.f32.mrf.mxu0
    %v1027 = vadd.f32 0.0, %v1026
    %1028 = vmatmul.f32.gmra.mxu0 %v885
    %v1029 = vpop.f32.mrf.mxu0
    %v1030 = vadd.f32 0.0, %v1029
    %1031 = vmatmul.f32.gmra.mxu0 %v888
    %v1032 = vpop.f32.mrf.mxu0
    %v1033 = vadd.f32 0.0, %v1032
    %1034 = vmatmul.f32.gmra.mxu0 %v891
    %v1035 = vpop.f32.mrf.mxu0
    %v1036 = vadd.f32 0.0, %v1035
    %1037 = vmatmul.f32.gmra.mxu0 %v894
    %v1038 = vpop.f32.mrf.mxu0
    %v1039 = vadd.f32 0.0, %v1038
    %1040 = vmatmul.f32.gmra.mxu0 %v897
    %v1041 = vpop.f32.mrf.mxu0
    %v1042 = vadd.f32 0.0, %v1041
    %1043 = vmatmul.f32.gmra.mxu0 %v900
    %v1044 = vpop.f32.mrf.mxu0
    %v1045 = vadd.f32 0.0, %v1044
    %1046 = vmatmul.f32.gmra.mxu0 %v903
    %v1047 = vpop.f32.mrf.mxu0
    %v1048 = vadd.f32 0.0, %v1047
    %1049 = vmatmul.f32.gmra.mxu0 %v906
    %v1050 = vpop.f32.mrf.mxu0
    %v1051 = vadd.f32 0.0, %v1050
    %1052 = vmatmul.f32.gmra.mxu0 %v909
    %v1053 = vpop.f32.mrf.mxu0
    %v1054 = vadd.f32 0.0, %v1053
    %1055 = vmatmul.f32.gmra.mxu0 %v912
    %v1056 = vpop.f32.mrf.mxu0
    %v1057 = vadd.f32 0.0, %v1056
    %1058 = vmatmul.f32.gmra.mxu0 %v915
    %v1059 = vpop.f32.mrf.mxu0
    %v1060 = vadd.f32 0.0, %v1059
    %1061 = vmatmul.f32.gmra.mxu0 %v918
    %v1062 = vpop.f32.mrf.mxu0
    %v1063 = vadd.f32 0.0, %v1062
    %1064 = vmatmul.f32.gmra.mxu0 %v921
    %v1065 = vpop.f32.mrf.mxu0
    %v1066 = vadd.f32 0.0, %v1065
    %1067 = vmatmul.f32.gmra.mxu0 %v924
    %v1068 = vpop.f32.mrf.mxu0
    %v1069 = vadd.f32 0.0, %v1068
    %1070 = vmatmul.f32.gmra.mxu0 %v927
    %v1071 = vpop.f32.mrf.mxu0
    %v1072 = vadd.f32 0.0, %v1071
    %1073 = vmatmul.f32.gmra.mxu0 %v930
    %v1074 = vpop.f32.mrf.mxu0
    %v1075 = vadd.f32 0.0, %v1074
    %1076 = vdwg.mxu0
    %1077 = vmatpush.msra.mxu0 %v947
    %1078 = vmatpush.msra.mxu0 %v946
    %1079 = vmatpush.msra.mxu0 %v945
    %1080 = vmatpush.msra.mxu0 %v944
    %1081 = vmatpush.msra.mxu0 %v943
    %1082 = vmatpush.msra.mxu0 %v942
    %1083 = vmatpush.msra.mxu0 %v941
    %1084 = vmatpush.msra.mxu0 %v940
    %1085 = vmatpush.msra.mxu0 %v939
    %1086 = vmatpush.msra.mxu0 %v938
    %1087 = vmatpush.msra.mxu0 %v937
    %1088 = vmatpush.msra.mxu0 %v936
    %1089 = vmatpush.msra.mxu0 %v935
    %1090 = vmatpush.msra.mxu0 %v934
    %1091 = vmatpush.msra.mxu0 %v933
    %1092 = vmatpush.msra.mxu0 %v932
    %1093 = vmatmul.f32.gmra.mxu0 %v628
    %v1094 = vpop.f32.mrf.mxu0
    %v1095 = vadd.f32 %v982, %v1094
    %1096 = vmatmul.f32.gmra.mxu0 %v631
    %v1097 = vpop.f32.mrf.mxu0
    %v1098 = vadd.f32 %v985, %v1097
    %1099 = vmatmul.f32.gmra.mxu0 %v634
    %v1100 = vpop.f32.mrf.mxu0
    %v1101 = vadd.f32 %v988, %v1100
    %1102 = vmatmul.f32.gmra.mxu0 %v637
    %v1103 = vpop.f32.mrf.mxu0
    %v1104 = vadd.f32 %v991, %v1103
    %1105 = vmatmul.f32.gmra.mxu0 %v640
    %v1106 = vpop.f32.mrf.mxu0
    %v1107 = vadd.f32 %v994, %v1106
    %1108 = vmatmul.f32.gmra.mxu0 %v643
    %v1109 = vpop.f32.mrf.mxu0
    %v1110 = vadd.f32 %v997, %v1109
    %1111 = vmatmul.f32.gmra.mxu0 %v646
    %v1112 = vpop.f32.mrf.mxu0
    %v1113 = vadd.f32 %v1000, %v1112
    %1114 = vmatmul.f32.gmra.mxu0 %v649
    %v1115 = vpop.f32.mrf.mxu0
    %v1116 = vadd.f32 %v1003, %v1115
    %1117 = vmatmul.f32.gmra.mxu0 %v652
    %v1118 = vpop.f32.mrf.mxu0
    %v1119 = vadd.f32 %v1006, %v1118
    %1120 = vmatmul.f32.gmra.mxu0 %v655
    %v1121 = vpop.f32.mrf.mxu0
    %v1122 = vadd.f32 %v1009, %v1121
    %1123 = vmatmul.f32.gmra.mxu0 %v658
    %v1124 = vpop.f32.mrf.mxu0
    %v1125 = vadd.f32 %v1012, %v1124
    %1126 = vmatmul.f32.gmra.mxu0 %v661
    %v1127 = vpop.f32.mrf.mxu0
    %v1128 = vadd.f32 %v1015, %v1127
    %1129 = vmatmul.f32.gmra.mxu0 %v664
    %v1130 = vpop.f32.mrf.mxu0
    %v1131 = vadd.f32 %v1018, %v1130
    %1132 = vmatmul.f32.gmra.mxu0 %v667
    %v1133 = vpop.f32.mrf.mxu0
    %v1134 = vadd.f32 %v1021, %v1133
    %1135 = vmatmul.f32.gmra.mxu0 %v670
    %v1136 = vpop.f32.mrf.mxu0
    %v1137 = vadd.f32 %v1024, %v1136
    %1138 = vmatmul.f32.gmra.mxu0 %v673
    %v1139 = vpop.f32.mrf.mxu0
    %v1140 = vadd.f32 %v1027, %v1139
    %1141 = vmatmul.f32.gmra.mxu0 %v676
    %v1142 = vpop.f32.mrf.mxu0
    %v1143 = vadd.f32 %v1030, %v1142
    %1144 = vmatmul.f32.gmra.mxu0 %v679
    %v1145 = vpop.f32.mrf.mxu0
    %v1146 = vadd.f32 %v1033, %v1145
    %1147 = vmatmul.f32.gmra.mxu0 %v682
    %v1148 = vpop.f32.mrf.mxu0
    %v1149 = vadd.f32 %v1036, %v1148
    %1150 = vmatmul.f32.gmra.mxu0 %v685
    %v1151 = vpop.f32.mrf.mxu0
    %v1152 = vadd.f32 %v1039, %v1151
    %1153 = vmatmul.f32.gmra.mxu0 %v688
    %v1154 = vpop.f32.mrf.mxu0
    %v1155 = vadd.f32 %v1042, %v1154
    %1156 = vmatmul.f32.gmra.mxu0 %v691
    %v1157 = vpop.f32.mrf.mxu0
    %v1158 = vadd.f32 %v1045, %v1157
    %1159 = vmatmul.f32.gmra.mxu0 %v694
    %v1160 = vpop.f32.mrf.mxu0
    %v1161 = vadd.f32 %v1048, %v1160
    %1162 = vmatmul.f32.gmra.mxu0 %v697
    %v1163 = vpop.f32.mrf.mxu0
    %v1164 = vadd.f32 %v1051, %v1163
    %1165 = vmatmul.f32.gmra.mxu0 %v700
    %v1166 = vpop.f32.mrf.mxu0
    %v1167 = vadd.f32 %v1054, %v1166
    %1168 = vmatmul.f32.gmra.mxu0 %v703
    %v1169 = vpop.f32.mrf.mxu0
    %v1170 = vadd.f32 %v1057, %v1169
    %1171 = vmatmul.f32.gmra.mxu0 %v706
    %v1172 = vpop.f32.mrf.mxu0
    %v1173 = vadd.f32 %v1060, %v1172
    %1174 = vmatmul.f32.gmra.mxu0 %v709
    %v1175 = vpop.f32.mrf.mxu0
    %v1176 = vadd.f32 %v1063, %v1175
    %1177 = vmatmul.f32.gmra.mxu0 %v712
    %v1178 = vpop.f32.mrf.mxu0
    %v1179 = vadd.f32 %v1066, %v1178
    %1180 = vmatmul.f32.gmra.mxu0 %v715
    %v1181 = vpop.f32.mrf.mxu0
    %v1182 = vadd.f32 %v1069, %v1181
    %1183 = vmatmul.f32.gmra.mxu0 %v718
    %v1184 = vpop.f32.mrf.mxu0
    %v1185 = vadd.f32 %v1072, %v1184
    %1186 = vmatmul.f32.gmra.mxu0 %v721
    %v1187 = vpop.f32.mrf.mxu0
    %v1188 = vadd.f32 %v1075, %v1187
    %1189 = vdwg.mxu0
    %v1190 = vld [vmem:[%s6] sm:$0x1]
    %v1192 = vperm.slane %v1190, 0
    %v1194 = vadd.f32 %v1095, %v1192
    %v1195 = vadd.f32 %v1098, %v1192
    %v1196 = vadd.f32 %v1101, %v1192
    %v1197 = vadd.f32 %v1104, %v1192
    %v1198 = vadd.f32 %v1107, %v1192
    %v1199 = vadd.f32 %v1110, %v1192
    %v1200 = vadd.f32 %v1113, %v1192
    %v1201 = vadd.f32 %v1116, %v1192
    %v1202 = vadd.f32 %v1119, %v1192
    %v1203 = vadd.f32 %v1122, %v1192
    %v1204 = vadd.f32 %v1125, %v1192
    %v1205 = vadd.f32 %v1128, %v1192
    %v1206 = vadd.f32 %v1131, %v1192
    %v1207 = vadd.f32 %v1134, %v1192
    %v1208 = vadd.f32 %v1137, %v1192
    %v1209 = vadd.f32 %v1140, %v1192
    %v1210 = vadd.f32 %v1143, %v1192
    %v1211 = vadd.f32 %v1146, %v1192
    %v1212 = vadd.f32 %v1149, %v1192
    %v1213 = vadd.f32 %v1152, %v1192
    %v1214 = vadd.f32 %v1155, %v1192
    %v1215 = vadd.f32 %v1158, %v1192
    %v1216 = vadd.f32 %v1161, %v1192
    %v1217 = vadd.f32 %v1164, %v1192
    %v1218 = vadd.f32 %v1167, %v1192
    %v1219 = vadd.f32 %v1170, %v1192
    %v1220 = vadd.f32 %v1173, %v1192
    %v1221 = vadd.f32 %v1176, %v1192
    %v1222 = vadd.f32 %v1179, %v1192
    %v1223 = vadd.f32 %v1182, %v1192
    %v1224 = vadd.f32 %v1185, %v1192
    %v1225 = vadd.f32 %v1188, %v1192
    %v1226 = vmax.f32 %v1194, 0.0
    %v1227 = vmax.f32 %v1195, 0.0
    %v1228 = vmax.f32 %v1196, 0.0
    %v1229 = vmax.f32 %v1197, 0.0
    %v1230 = vmax.f32 %v1198, 0.0
    %v1231 = vmax.f32 %v1199, 0.0
    %v1232 = vmax.f32 %v1200, 0.0
    %v1233 = vmax.f32 %v1201, 0.0
    %v1234 = vmax.f32 %v1202, 0.0
    %v1235 = vmax.f32 %v1203, 0.0
    %v1236 = vmax.f32 %v1204, 0.0
    %v1237 = vmax.f32 %v1205, 0.0
    %v1238 = vmax.f32 %v1206, 0.0
    %v1239 = vmax.f32 %v1207, 0.0
    %v1240 = vmax.f32 %v1208, 0.0
    %v1241 = vmax.f32 %v1209, 0.0
    %v1242 = vmax.f32 %v1210, 0.0
    %v1243 = vmax.f32 %v1211, 0.0
    %v1244 = vmax.f32 %v1212, 0.0
    %v1245 = vmax.f32 %v1213, 0.0
    %v1246 = vmax.f32 %v1214, 0.0
    %v1247 = vmax.f32 %v1215, 0.0
    %v1248 = vmax.f32 %v1216, 0.0
    %v1249 = vmax.f32 %v1217, 0.0
    %v1250 = vmax.f32 %v1218, 0.0
    %v1251 = vmax.f32 %v1219, 0.0
    %v1252 = vmax.f32 %v1220, 0.0
    %v1253 = vmax.f32 %v1221, 0.0
    %v1254 = vmax.f32 %v1222, 0.0
    %v1255 = vmax.f32 %v1223, 0.0
    %v1256 = vmax.f32 %v1224, 0.0
    %v1257 = vmax.f32 %v1225, 0.0
    %v1258 = vld [vmem:[%s7] sm:$0xff]
    %v1259 = vld [vmem:[%s7 + $0x8] sm:$0xff]
    %v1260 = vld [vmem:[%s7 + $0x10] sm:$0xff]
    %v1261 = vld [vmem:[%s7 + $0x18] sm:$0xff]
    %v1262 = vld [vmem:[%s7 + $0x20] sm:$0xff]
    %v1263 = vld [vmem:[%s7 + $0x28] sm:$0xff]
    %v1264 = vld [vmem:[%s7 + $0x30] sm:$0xff]
    %v1265 = vld [vmem:[%s7 + $0x38] sm:$0xff]
    %v1266 = vld [vmem:[%s7 + $0x40] sm:$0xff]
    %v1267 = vld [vmem:[%s7 + $0x48] sm:$0xff]
    %v1268 = vld [vmem:[%s7 + $0x50] sm:$0xff]
    %v1269 = vld [vmem:[%s7 + $0x58] sm:$0xff]
    %v1270 = vld [vmem:[%s7 + $0x60] sm:$0xff]
    %v1271 = vld [vmem:[%s7 + $0x68] sm:$0xff]
    %v1272 = vld [vmem:[%s7 + $0x70] sm:$0xff]
    %v1273 = vld [vmem:[%s7 + $0x78] sm:$0xff]
    %v1274 = vld [vmem:[%s8] sm:$0x1]
    %v1276 = vperm.slane %v1274, 0
    %1278 = vmatpush.msra.mxu0 %v1273
    %1279 = vmatpush.msra.mxu0 %v1272
    %1280 = vmatpush.msra.mxu0 %v1271
    %1281 = vmatpush.msra.mxu0 %v1270
    %1282 = vmatpush.msra.mxu0 %v1269
    %1283 = vmatpush.msra.mxu0 %v1268
    %1284 = vmatpush.msra.mxu0 %v1267
    %1285 = vmatpush.msra.mxu0 %v1266
    %1286 = vmatpush.msra.mxu0 %v1265
    %1287 = vmatpush.msra.mxu0 %v1264
    %1288 = vmatpush.msra.mxu0 %v1263
    %1289 = vmatpush.msra.mxu0 %v1262
    %1290 = vmatpush.msra.mxu0 %v1261
    %1291 = vmatpush.msra.mxu0 %v1260
    %1292 = vmatpush.msra.mxu0 %v1259
    %1293 = vmatpush.msra.mxu0 %v1258
    %1294 = vmatmul.f32.gmra.mxu0 %v1226
    %v1295 = vpop.f32.mrf.mxu0
    %v1296 = vadd.f32 %v1276, %v1295
    %1297 = vmatmul.f32.gmra.mxu0 %v1227
    %v1298 = vpop.f32.mrf.mxu0
    %v1299 = vadd.f32 %v1276, %v1298
    %1300 = vmatmul.f32.gmra.mxu0 %v1228
    %v1301 = vpop.f32.mrf.mxu0
    %v1302 = vadd.f32 %v1276, %v1301
    %1303 = vmatmul.f32.gmra.mxu0 %v1229
    %v1304 = vpop.f32.mrf.mxu0
    %v1305 = vadd.f32 %v1276, %v1304
    %1306 = vmatmul.f32.gmra.mxu0 %v1230
    %v1307 = vpop.f32.mrf.mxu0
    %v1308 = vadd.f32 %v1276, %v1307
    %1309 = vmatmul.f32.gmra.mxu0 %v1231
    %v1310 = vpop.f32.mrf.mxu0
    %v1311 = vadd.f32 %v1276, %v1310
    %1312 = vmatmul.f32.gmra.mxu0 %v1232
    %v1313 = vpop.f32.mrf.mxu0
    %v1314 = vadd.f32 %v1276, %v1313
    %1315 = vmatmul.f32.gmra.mxu0 %v1233
    %v1316 = vpop.f32.mrf.mxu0
    %v1317 = vadd.f32 %v1276, %v1316
    %1318 = vmatmul.f32.gmra.mxu0 %v1234
    %v1319 = vpop.f32.mrf.mxu0
    %v1320 = vadd.f32 %v1276, %v1319
    %1321 = vmatmul.f32.gmra.mxu0 %v1235
    %v1322 = vpop.f32.mrf.mxu0
    %v1323 = vadd.f32 %v1276, %v1322
    %1324 = vmatmul.f32.gmra.mxu0 %v1236
    %v1325 = vpop.f32.mrf.mxu0
    %v1326 = vadd.f32 %v1276, %v1325
    %1327 = vmatmul.f32.gmra.mxu0 %v1237
    %v1328 = vpop.f32.mrf.mxu0
    %v1329 = vadd.f32 %v1276, %v1328
    %1330 = vmatmul.f32.gmra.mxu0 %v1238
    %v1331 = vpop.f32.mrf.mxu0
    %v1332 = vadd.f32 %v1276, %v1331
    %1333 = vmatmul.f32.gmra.mxu0 %v1239
    %v1334 = vpop.f32.mrf.mxu0
    %v1335 = vadd.f32 %v1276, %v1334
    %1336 = vmatmul.f32.gmra.mxu0 %v1240
    %v1337 = vpop.f32.mrf.mxu0
    %v1338 = vadd.f32 %v1276, %v1337
    %1339 = vmatmul.f32.gmra.mxu0 %v1241
    %v1340 = vpop.f32.mrf.mxu0
    %v1341 = vadd.f32 %v1276, %v1340
    %1342 = vmatmul.f32.gmra.mxu0 %v1242
    %v1343 = vpop.f32.mrf.mxu0
    %v1344 = vadd.f32 %v1276, %v1343
    %1345 = vmatmul.f32.gmra.mxu0 %v1243
    %v1346 = vpop.f32.mrf.mxu0
    %v1347 = vadd.f32 %v1276, %v1346
    %1348 = vmatmul.f32.gmra.mxu0 %v1244
    %v1349 = vpop.f32.mrf.mxu0
    %v1350 = vadd.f32 %v1276, %v1349
    %1351 = vmatmul.f32.gmra.mxu0 %v1245
    %v1352 = vpop.f32.mrf.mxu0
    %v1353 = vadd.f32 %v1276, %v1352
    %1354 = vmatmul.f32.gmra.mxu0 %v1246
    %v1355 = vpop.f32.mrf.mxu0
    %v1356 = vadd.f32 %v1276, %v1355
    %1357 = vmatmul.f32.gmra.mxu0 %v1247
    %v1358 = vpop.f32.mrf.mxu0
    %v1359 = vadd.f32 %v1276, %v1358
    %1360 = vmatmul.f32.gmra.mxu0 %v1248
    %v1361 = vpop.f32.mrf.mxu0
    %v1362 = vadd.f32 %v1276, %v1361
    %1363 = vmatmul.f32.gmra.mxu0 %v1249
    %v1364 = vpop.f32.mrf.mxu0
    %v1365 = vadd.f32 %v1276, %v1364
    %1366 = vmatmul.f32.gmra.mxu0 %v1250
    %v1367 = vpop.f32.mrf.mxu0
    %v1368 = vadd.f32 %v1276, %v1367
    %1369 = vmatmul.f32.gmra.mxu0 %v1251
    %v1370 = vpop.f32.mrf.mxu0
    %v1371 = vadd.f32 %v1276, %v1370
    %1372 = vmatmul.f32.gmra.mxu0 %v1252
    %v1373 = vpop.f32.mrf.mxu0
    %v1374 = vadd.f32 %v1276, %v1373
    %1375 = vmatmul.f32.gmra.mxu0 %v1253
    %v1376 = vpop.f32.mrf.mxu0
    %v1377 = vadd.f32 %v1276, %v1376
    %1378 = vmatmul.f32.gmra.mxu0 %v1254
    %v1379 = vpop.f32.mrf.mxu0
    %v1380 = vadd.f32 %v1276, %v1379
    %1381 = vmatmul.f32.gmra.mxu0 %v1255
    %v1382 = vpop.f32.mrf.mxu0
    %v1383 = vadd.f32 %v1276, %v1382
    %1384 = vmatmul.f32.gmra.mxu0 %v1256
    %v1385 = vpop.f32.mrf.mxu0
    %v1386 = vadd.f32 %v1276, %v1385
    %1387 = vmatmul.f32.gmra.mxu0 %v1257
    %v1388 = vpop.f32.mrf.mxu0
    %v1389 = vadd.f32 %v1276, %v1388
    %1390 = vdwg.mxu0
    %v1391 = vmax.f32 %v1296, 0.0
    %v1392 = vmax.f32 %v1299, 0.0
    %v1393 = vmax.f32 %v1302, 0.0
    %v1394 = vmax.f32 %v1305, 0.0
    %v1395 = vmax.f32 %v1308, 0.0
    %v1396 = vmax.f32 %v1311, 0.0
    %v1397 = vmax.f32 %v1314, 0.0
    %v1398 = vmax.f32 %v1317, 0.0
    %v1399 = vmax.f32 %v1320, 0.0
    %v1400 = vmax.f32 %v1323, 0.0
    %v1401 = vmax.f32 %v1326, 0.0
    %v1402 = vmax.f32 %v1329, 0.0
    %v1403 = vmax.f32 %v1332, 0.0
    %v1404 = vmax.f32 %v1335, 0.0
    %v1405 = vmax.f32 %v1338, 0.0
    %v1406 = vmax.f32 %v1341, 0.0
    %v1407 = vmax.f32 %v1344, 0.0
    %v1408 = vmax.f32 %v1347, 0.0
    %v1409 = vmax.f32 %v1350, 0.0
    %v1410 = vmax.f32 %v1353, 0.0
    %v1411 = vmax.f32 %v1356, 0.0
    %v1412 = vmax.f32 %v1359, 0.0
    %v1413 = vmax.f32 %v1362, 0.0
    %v1414 = vmax.f32 %v1365, 0.0
    %v1415 = vmax.f32 %v1368, 0.0
    %v1416 = vmax.f32 %v1371, 0.0
    %v1417 = vmax.f32 %v1374, 0.0
    %v1418 = vmax.f32 %v1377, 0.0
    %v1419 = vmax.f32 %v1380, 0.0
    %v1420 = vmax.f32 %v1383, 0.0
    %v1421 = vmax.f32 %v1386, 0.0
    %v1422 = vmax.f32 %v1389, 0.0
    %v1423 = vlaneseq
    %v1424 = vshrl.u32 %v1423, 7
    %v1425 = vadd.s32 %v1424, 8
    %v1426 = vperm.slane %v124, 0
    %v1427 = vperm.slane %v124, 1
    %vm1428 = vcmp.eq.s32.totalorder %v1424, %v1426
    %vm1429 = vcmp.eq.s32.totalorder %v1424, %v1427
    %vm1430 = vcmp.eq.s32.totalorder %v1425, %v1426
    %vm1431 = vcmp.eq.s32.totalorder %v1425, %v1427
    %v1432 = vsel %vm1428, 1, 0
    %v1433 = vsel %vm1429, 1, 0
    %v1434 = vsel %vm1430, 1, 0
    %v1435 = vsel %vm1431, 1, 0
    %v1436 = vcvt.s32.f32 %v1432
    %v1437 = vcvt.s32.f32 %v1433
    %v1438 = vcvt.s32.f32 %v1434
    %v1439 = vcvt.s32.f32 %v1435
    %v1440 = vld [vmem:[#allocation2] sm:$0xff]
    %v1441 = vld [vmem:[#allocation2 + $0x8] sm:$0xff]
    %1442 = vmatpush.msra.mxu0 %v1406
    %1443 = vmatpush.msra.mxu0 %v1405
    %1444 = vmatpush.msra.mxu0 %v1404
    %1445 = vmatpush.msra.mxu0 %v1403
    %1446 = vmatpush.msra.mxu0 %v1402
    %1447 = vmatpush.msra.mxu0 %v1401
    %1448 = vmatpush.msra.mxu0 %v1400
    %1449 = vmatpush.msra.mxu0 %v1399
    %1450 = vmatpush.msra.mxu0 %v1398
    %1451 = vmatpush.msra.mxu0 %v1397
    %1452 = vmatpush.msra.mxu0 %v1396
    %1453 = vmatpush.msra.mxu0 %v1395
    %1454 = vmatpush.msra.mxu0 %v1394
    %1455 = vmatpush.msra.mxu0 %v1393
    %1456 = vmatpush.msra.mxu0 %v1392
    %1457 = vmatpush.msra.mxu0 %v1391
    %1458 = vmatmul.f32.gmra.mxu0 %v1436
    %v1459 = vpop.f32.mrf.mxu0
    %v1460 = vadd.f32 0.0, %v1459
    %1461 = vmatmul.f32.gmra.mxu0 %v1438
    %v1462 = vpop.f32.mrf.mxu0
    %v1463 = vadd.f32 0.0, %v1462
    %1464 = vdwg.mxu0
    %1465 = vmatpush.msra.mxu0 %v1422
    %1466 = vmatpush.msra.mxu0 %v1421
    %1467 = vmatpush.msra.mxu0 %v1420
    %1468 = vmatpush.msra.mxu0 %v1419
    %1469 = vmatpush.msra.mxu0 %v1418
    %1470 = vmatpush.msra.mxu0 %v1417
    %1471 = vmatpush.msra.mxu0 %v1416
    %1472 = vmatpush.msra.mxu0 %v1415
    %1473 = vmatpush.msra.mxu0 %v1414
    %1474 = vmatpush.msra.mxu0 %v1413
    %1475 = vmatpush.msra.mxu0 %v1412
    %1476 = vmatpush.msra.mxu0 %v1411
    %1477 = vmatpush.msra.mxu0 %v1410
    %1478 = vmatpush.msra.mxu0 %v1409
    %1479 = vmatpush.msra.mxu0 %v1408
    %1480 = vmatpush.msra.mxu0 %v1407
    %1481 = vmatmul.f32.gmra.mxu0 %v1437
    %v1482 = vpop.f32.mrf.mxu0
    %v1483 = vadd.f32 %v1460, %v1482
    %1484 = vmatmul.f32.gmra.mxu0 %v1439
    %v1485 = vpop.f32.mrf.mxu0
    %v1486 = vadd.f32 %v1463, %v1485
    %1487 = vdwg.mxu0
    %v1488 = vadd.f32 %v1440, %v1483
    %v1489 = vadd.f32 %v1441, %v1486
    %1490 = vst [vmem:[#allocation2] sm:$0xff] %v1488
    %1491 = vst [vmem:[#allocation2 + $0x8] sm:$0xff] %v1489
    // Predicated region
    $region70: #{_lambda_.3} parent=1 // pred_check
      %p1492 = pneg %p54
    $region71: #{_lambda_.3} parent=1 // pred_check_branch
      %1494 = sbr.rel (%p1492) target = $region73
    $region72: #{_lambda_.3} parent=1 // pred_region
      %v1495 = vld [vmem:[%s0] sm:$0xff]
      %v1496 = vld [vmem:[%s0 + $0x8] sm:$0xff]
      %v1497 = vld [vmem:[%s10] sm:$0xff]
      %v1498 = vld [vmem:[%s10 + $0x8] sm:$0xff]
      %v1499 = vld [vmem:[%s10 + $0x10] sm:$0xff]
      %v1500 = vld [vmem:[%s10 + $0x18] sm:$0xff]
      %v1501 = vld [vmem:[%s10 + $0x20] sm:$0xff]
      %v1502 = vld [vmem:[%s10 + $0x28] sm:$0xff]
      %v1503 = vld [vmem:[%s10 + $0x30] sm:$0xff]
      %v1504 = vld [vmem:[%s10 + $0x38] sm:$0xff]
      %v1505 = vld [vmem:[%s10 + $0x40] sm:$0xff]
      %v1506 = vld [vmem:[%s10 + $0x48] sm:$0xff]
      %v1507 = vld [vmem:[%s10 + $0x50] sm:$0xff]
      %v1508 = vld [vmem:[%s10 + $0x58] sm:$0xff]
      %v1509 = vld [vmem:[%s10 + $0x60] sm:$0xff]
      %v1510 = vld [vmem:[%s10 + $0x68] sm:$0xff]
      %v1511 = vld [vmem:[%s10 + $0x70] sm:$0xff]
      %v1512 = vld [vmem:[%s10 + $0x78] sm:$0xff]
      %v1513 = vld [vmem:[#allocation2] sm:$0xff]
      %v1514 = vld [vmem:[#allocation2 + $0x8] sm:$0xff]
      %v1515 = vld [vmem:[%s11] sm:$0xff]
      %v1516 = vld [vmem:[%s11 + $0x8] sm:$0xff]
      %v1517 = vld [vmem:[%s11 + $0x10] sm:$0xff]
      %v1518 = vld [vmem:[%s11 + $0x18] sm:$0xff]
      %v1519 = vld [vmem:[%s11 + $0x20] sm:$0xff]
      %v1520 = vld [vmem:[%s11 + $0x28] sm:$0xff]
      %v1521 = vld [vmem:[%s11 + $0x30] sm:$0xff]
      %v1522 = vld [vmem:[%s11 + $0x38] sm:$0xff]
      %v1523 = vld [vmem:[%s11 + $0x40] sm:$0xff]
      %v1524 = vld [vmem:[%s11 + $0x48] sm:$0xff]
      %v1525 = vld [vmem:[%s11 + $0x50] sm:$0xff]
      %v1526 = vld [vmem:[%s11 + $0x58] sm:$0xff]
      %v1527 = vld [vmem:[%s11 + $0x60] sm:$0xff]
      %v1528 = vld [vmem:[%s11 + $0x68] sm:$0xff]
      %v1529 = vld [vmem:[%s11 + $0x70] sm:$0xff]
      %v1530 = vld [vmem:[%s11 + $0x78] sm:$0xff]
      %1531 = vmatpush.msra.mxu0 %v1530
      %1532 = vmatpush.msra.mxu0 %v1529
      %1533 = vmatpush.msra.mxu0 %v1528
      %1534 = vmatpush.msra.mxu0 %v1527
      %1535 = vmatpush.msra.mxu0 %v1526
      %1536 = vmatpush.msra.mxu0 %v1525
      %1537 = vmatpush.msra.mxu0 %v1524
      %1538 = vmatpush.msra.mxu0 %v1523
      %1539 = vmatpush.msra.mxu0 %v1522
      %1540 = vmatpush.msra.mxu0 %v1521
      %1541 = vmatpush.msra.mxu0 %v1520
      %1542 = vmatpush.msra.mxu0 %v1519
      %1543 = vmatpush.msra.mxu0 %v1518
      %1544 = vmatpush.msra.mxu0 %v1517
      %1545 = vmatpush.msra.mxu0 %v1516
      %1546 = vmatpush.msra.mxu0 %v1515
      %1547 = vmatmul.f32.gmra.mxu0 %v1513
      %v1548 = vpop.f32.mrf.mxu0
      %v1549 = vadd.f32 0.0, %v1548
      %1550 = vmatmul.f32.gmra.mxu0 %v1514
      %v1551 = vpop.f32.mrf.mxu0
      %v1552 = vadd.f32 0.0, %v1551
      %1553 = vdwg.mxu0
      %1554 = vmatpush.msra.mxu0 %v1512
      %1555 = vmatpush.msra.mxu0 %v1511
      %1556 = vmatpush.msra.mxu0 %v1510
      %1557 = vmatpush.msra.mxu0 %v1509
      %1558 = vmatpush.msra.mxu0 %v1508
      %1559 = vmatpush.msra.mxu0 %v1507
      %1560 = vmatpush.msra.mxu0 %v1506
      %1561 = vmatpush.msra.mxu0 %v1505
      %1562 = vmatpush.msra.mxu0 %v1504
      %1563 = vmatpush.msra.mxu0 %v1503
      %1564 = vmatpush.msra.mxu0 %v1502
      %1565 = vmatpush.msra.mxu0 %v1501
      %1566 = vmatpush.msra.mxu0 %v1500
      %1567 = vmatpush.msra.mxu0 %v1499
      %1568 = vmatpush.msra.mxu0 %v1498
      %1569 = vmatpush.msra.mxu0 %v1497
      %1570 = vmatmul.f32.gmra.mxu0 %v1495
      %v1571 = vpop.f32.mrf.mxu0
      %v1572 = vadd.f32 %v1549, %v1571
      %1573 = vmatmul.f32.gmra.mxu0 %v1496
      %v1574 = vpop.f32.mrf.mxu0
      %v1575 = vadd.f32 %v1552, %v1574
      %1576 = vdwg.mxu0
      %v1577 = vld [vmem:[%s9] sm:$0xff]
      %v1578 = vld [vmem:[%s9 + $0x8] sm:$0xff]
      %v1579 = vld [vmem:[%s12] sm:$0xff]
      %v1580 = vld [vmem:[%s12 + $0x8] sm:$0xff]
      %v1581 = vld [vmem:[%s12 + $0x10] sm:$0xff]
      %v1582 = vld [vmem:[%s12 + $0x18] sm:$0xff]
      %v1583 = vld [vmem:[%s12 + $0x20] sm:$0xff]
      %v1584 = vld [vmem:[%s12 + $0x28] sm:$0xff]
      %v1585 = vld [vmem:[%s12 + $0x30] sm:$0xff]
      %v1586 = vld [vmem:[%s12 + $0x38] sm:$0xff]
      %v1587 = vld [vmem:[%s12 + $0x40] sm:$0xff]
      %v1588 = vld [vmem:[%s12 + $0x48] sm:$0xff]
      %v1589 = vld [vmem:[%s12 + $0x50] sm:$0xff]
      %v1590 = vld [vmem:[%s12 + $0x58] sm:$0xff]
      %v1591 = vld [vmem:[%s12 + $0x60] sm:$0xff]
      %v1592 = vld [vmem:[%s12 + $0x68] sm:$0xff]
      %v1593 = vld [vmem:[%s12 + $0x70] sm:$0xff]
      %v1594 = vld [vmem:[%s12 + $0x78] sm:$0xff]
      %1595 = vmatpush.msra.mxu0 %v1594
      %1596 = vmatpush.msra.mxu0 %v1593
      %1597 = vmatpush.msra.mxu0 %v1592
      %1598 = vmatpush.msra.mxu0 %v1591
      %1599 = vmatpush.msra.mxu0 %v1590
      %1600 = vmatpush.msra.mxu0 %v1589
      %1601 = vmatpush.msra.mxu0 %v1588
      %1602 = vmatpush.msra.mxu0 %v1587
      %1603 = vmatpush.msra.mxu0 %v1586
      %1604 = vmatpush.msra.mxu0 %v1585
      %1605 = vmatpush.msra.mxu0 %v1584
      %1606 = vmatpush.msra.mxu0 %v1583
      %1607 = vmatpush.msra.mxu0 %v1582
      %1608 = vmatpush.msra.mxu0 %v1581
      %1609 = vmatpush.msra.mxu0 %v1580
      %1610 = vmatpush.msra.mxu0 %v1579
      %1611 = vmatmul.f32.gmra.mxu0 %v1577
      %v1612 = vpop.f32.mrf.mxu0
      %v1613 = vadd.f32 0.0, %v1612
      %1614 = vmatmul.f32.gmra.mxu0 %v1578
      %v1615 = vpop.f32.mrf.mxu0
      %v1616 = vadd.f32 0.0, %v1615
      %1617 = vdwg.mxu0
      %v1618 = vadd.f32 %v1572, %v1613
      %v1619 = vadd.f32 %v1575, %v1616
      %v1620 = vld [vmem:[%s13] sm:$0x1]
      %v1622 = vperm.slane %v1620, 0
      %v1624 = vadd.f32 %v1618, %v1622
      %v1625 = vadd.f32 %v1619, %v1622
      %v1626 = vmax.f32 %v1624, 0.0
      %v1627 = vmax.f32 %v1625, 0.0
      %v1628 = vld [vmem:[%s14] sm:$0xff]
      %v1629 = vld [vmem:[%s14 + $0x8] sm:$0xff]
      %v1630 = vld [vmem:[%s14 + $0x10] sm:$0xff]
      %v1631 = vld [vmem:[%s14 + $0x18] sm:$0xff]
      %v1632 = vld [vmem:[%s14 + $0x20] sm:$0xff]
      %v1633 = vld [vmem:[%s14 + $0x28] sm:$0xff]
      %v1634 = vld [vmem:[%s14 + $0x30] sm:$0xff]
      %v1635 = vld [vmem:[%s14 + $0x38] sm:$0xff]
      %v1636 = vld [vmem:[%s14 + $0x40] sm:$0xff]
      %v1637 = vld [vmem:[%s14 + $0x48] sm:$0xff]
      %v1638 = vld [vmem:[%s14 + $0x50] sm:$0xff]
      %v1639 = vld [vmem:[%s14 + $0x58] sm:$0xff]
      %v1640 = vld [vmem:[%s14 + $0x60] sm:$0xff]
      %v1641 = vld [vmem:[%s14 + $0x68] sm:$0xff]
      %v1642 = vld [vmem:[%s14 + $0x70] sm:$0xff]
      %v1643 = vld [vmem:[%s14 + $0x78] sm:$0xff]
      %v1644 = vld [vmem:[%s15] sm:$0x1]
      %v1646 = vperm.slane %v1644, 0
      %1648 = vmatpush.msra.mxu0 %v1643
      %1649 = vmatpush.msra.mxu0 %v1642
      %1650 = vmatpush.msra.mxu0 %v1641
      %1651 = vmatpush.msra.mxu0 %v1640
      %1652 = vmatpush.msra.mxu0 %v1639
      %1653 = vmatpush.msra.mxu0 %v1638
      %1654 = vmatpush.msra.mxu0 %v1637
      %1655 = vmatpush.msra.mxu0 %v1636
      %1656 = vmatpush.msra.mxu0 %v1635
      %1657 = vmatpush.msra.mxu0 %v1634
      %1658 = vmatpush.msra.mxu0 %v1633
      %1659 = vmatpush.msra.mxu0 %v1632
      %1660 = vmatpush.msra.mxu0 %v1631
      %1661 = vmatpush.msra.mxu0 %v1630
      %1662 = vmatpush.msra.mxu0 %v1629
      %1663 = vmatpush.msra.mxu0 %v1628
      %1664 = vmatmul.f32.gmra.mxu0 %v1626
      %v1665 = vpop.f32.mrf.mxu0
      %v1666 = vadd.f32 %v1646, %v1665
      %1667 = vmatmul.f32.gmra.mxu0 %v1627
      %v1668 = vpop.f32.mrf.mxu0
      %v1669 = vadd.f32 %v1646, %v1668
      %1670 = vdwg.mxu0
      %v1671 = vmax.f32 %v1666, 0.0
      %v1672 = vmax.f32 %v1669, 0.0
      %1673 = vst [vmem:[#allocation3] sm:$0xff] %v1671
      %1674 = vst [vmem:[#allocation3 + $0x8] sm:$0xff] %v1672
    $region73: #{_lambda_.3} parent=1 // pred_fallthru
      _
    // Predicated region
    $region74: #{_lambda_.3} parent=1 // pred_check
      _
    $region75: #{_lambda_.3} parent=1 // pred_check_branch
      %1676 = sbr.rel (0) target = $region77
    $region76: #{_lambda_.3} parent=1 // pred_region
      %1678 = vsyncadd [#allocation4], 0
      %s1679 = sshll.u32 [#allocation3], 4
      %s1680 = int_to_ptr.vmem [resolvable:$true] %s1679
      %s1681 = sshll.u32 %s16, 4
      %s1682 = int_to_ptr.hbm [resolvable:$true] %s1681
      %1687 = dma.vmem_to_hbm [thread:$0]  %s1680, 256, %s1682, [#allocation4], 128, 128, 8
    $region77: #{_lambda_.3} parent=1 // pred_fallthru
      _
    // Predicated region
    $region78: #{_lambda_.3} parent=1 // pred_check
      _
    $region79: #{_lambda_.3} parent=1 // pred_check_branch
      %1689 = sbr.rel (0) target = $region81
    $region80: #{_lambda_.3} parent=1 // pred_region
      %1691 = dma.done [#allocation4], 256
    $region81: #{_lambda_.3} parent=1 // pred_fallthru
      _
    %1692 = vsyncpa [#allocation4], 1

</llo_original>
